<compile_context>
chip_gen: v6e
topology: v6e:2x2x1
jax: 0.10.0
libtpu: 0.0.40
codegen_flags: <defaults>
</compile_context>

<pallas_src>
import functools

import jax
import jax.numpy as jnp
from jax.experimental import pallas as pl
from jax.experimental.pallas import tpu as pltpu

IN_DIM, HID_DIM, OUT_DIM = 784, 400, 10
HID_PAD, OUT_PAD = 512, 128               # lane-aligned (multiples of 128)


def mlp_kernel(x_ref, w1_ref, b1_ref, w2_ref, b2_ref, w3_ref, o_ref):
    # hot path: 3 MXU matmuls (bf16 in, f32 acc) + relu / casts on the VPU
    x = x_ref[...].astype(jnp.bfloat16)                               # (TB, 784)
    h1 = jnp.dot(x, w1_ref[...], preferred_element_type=jnp.float32) + b1_ref[...]
    h1 = jnp.maximum(h1, 0.0).astype(jnp.bfloat16)                    # (TB, 512)
    h2 = jnp.dot(h1, w2_ref[...], preferred_element_type=jnp.float32) + b2_ref[...]
    h2 = jnp.maximum(h2, 0.0).astype(jnp.bfloat16)                    # (TB, 512)
    o_ref[...] = jnp.dot(h2, w3_ref[...],
                         preferred_element_type=jnp.float32).astype(o_ref.dtype)


def init_params(key):
    """PyTorch nn.Linear default init: U(-1/sqrt(fan_in), +1/sqrt(fan_in)).
    Returned in logical (in, out) layout, f32, unpadded (linear3 has no bias)."""
    k1, k2, k3, k4, k5 = jax.random.split(key, 5)

    def uniform(k, shape, fan_in):
        bound = 1.0 / jnp.sqrt(fan_in)
        return jax.random.uniform(k, shape, jnp.float32, -bound, bound)

    w1 = uniform(k1, (IN_DIM, HID_DIM), float(IN_DIM))
    b1 = uniform(k2, (1, HID_DIM), float(IN_DIM))
    w2 = uniform(k3, (HID_DIM, HID_DIM), float(HID_DIM))
    b2 = uniform(k4, (1, HID_DIM), float(HID_DIM))
    w3 = uniform(k5, (HID_DIM, OUT_DIM), float(HID_DIM))
    return w1, b1, w2, b2, w3


def pad_params(params):
    """One-time lane-aligned zero padding + bf16 cast for weights.  Only the
    OUTPUT dims are padded (400->512, 10->128); layer-1 keeps K=784 since x is
    fed unpadded.  Biases stay f32 (they add into the f32 accumulator).  Zero
    padding keeps padded lanes exactly zero through relu and later matmuls."""
    w1, b1, w2, b2, w3 = params
    w1p = jnp.zeros((IN_DIM, HID_PAD), jnp.float32).at[:, :HID_DIM].set(w1)
    b1p = jnp.zeros((1, HID_PAD), jnp.float32).at[:, :HID_DIM].set(b1)
    w2p = jnp.zeros((HID_PAD, HID_PAD), jnp.float32).at[:HID_DIM, :HID_DIM].set(w2)
    b2p = jnp.zeros((1, HID_PAD), jnp.float32).at[:, :HID_DIM].set(b2)
    w3p = jnp.zeros((HID_PAD, OUT_PAD), jnp.float32).at[:HID_DIM, :OUT_DIM].set(w3)
    return (w1p.astype(jnp.bfloat16), b1p,
            w2p.astype(jnp.bfloat16), b2p,
            w3p.astype(jnp.bfloat16))


def _round_up(n, m):
    return ((n + m - 1) // m) * m


def _choose_tiling(B, tb_cap):
    """Pick (padded batch, batch tile).  Small batches -> one sublane-aligned
    tile; larger batches -> >=2 grid steps (v7x megacore), tile capped at
    tb_cap and then shrunk (multiple of 8) to minimize batch-pad waste."""
    Bp = _round_up(B, 8)
    if Bp <= 256:
        return Bp, Bp
    tb = min(tb_cap, _round_up(pl.cdiv(Bp, 2), 256))
    grid = pl.cdiv(Bp, tb)
    tb = _round_up(pl.cdiv(Bp, grid), 8)
    return grid * tb, tb


@functools.partial(jax.jit, static_argnames=("tb_cap",))
def net_forward(x, padded_params, *, tb_cap=1024):
    """Forward pass of Net. x: any shape whose rows flatten to 784 features."""
    B = x.size // IN_DIM
    x2d = x.reshape(B, IN_DIM).astype(jnp.float32)

    Bp, TB = _choose_tiling(B, tb_cap)
    if Bp != B:
        x2d = jnp.pad(x2d, ((0, Bp - B), (0, 0)))   # fuses under jit
    grid = Bp // TB

    w1, b1, w2, b2, w3 = padded_params

    def resident(shape):
        return pl.BlockSpec(shape, lambda i: (0, 0))     # stays in VMEM

    weight_bytes = 2 * (IN_DIM * HID_PAD + HID_PAD * HID_PAD + HID_PAD * OUT_PAD)
    cost = pl.CostEstimate(
        flops=2 * Bp * (IN_DIM * HID_PAD + HID_PAD * HID_PAD + HID_PAD * OUT_PAD),
        transcendentals=0,
        bytes_accessed=Bp * IN_DIM * 4 + Bp * OUT_PAD * 2
                       + weight_bytes + 2 * HID_PAD * 4 * 2)

    out = pl.pallas_call(
        mlp_kernel,
        out_shape=jax.ShapeDtypeStruct((Bp, OUT_PAD), jnp.bfloat16),
        grid=(grid,),
        in_specs=[
            pl.BlockSpec((TB, IN_DIM), lambda i: (i, 0)),   # x: tiled over batch,
                                                            # 784 == full last dim
            resident((IN_DIM, HID_PAD)),                    # w1
            resident((1, HID_PAD)),                         # b1
            resident((HID_PAD, HID_PAD)),                   # w2
            resident((1, HID_PAD)),                         # b2
            resident((HID_PAD, OUT_PAD)),                   # w3
        ],
        out_specs=pl.BlockSpec((TB, OUT_PAD), lambda i: (i, 0)),
        compiler_params=pltpu.CompilerParams(
            dimension_semantics=("parallel",),
            vmem_limit_bytes=40 * 1024 * 1024),
        cost_estimate=cost,
    )(x2d, w1, b1, w2, b2, w3)

    # slice off batch padding / lane padding; fuses under jit
    return out[:B, :OUT_DIM].astype(jnp.float32)


def reference_forward(x, params):
    B = x.size // IN_DIM
    x2d = x.reshape(B, IN_DIM).astype(jnp.float32)
    w1, b1, w2, b2, w3 = params
    h1 = jnp.maximum(x2d @ w1 + b1, 0.0)
    h2 = jnp.maximum(h1 @ w2 + b2, 0.0)
    return h2 @ w3


if __name__ == "__main__":
    key = jax.random.PRNGKey(0)
    kx, kp = jax.random.split(key)

    # MNIST-like NCHW input, small batch
    x = jax.random.normal(kx, (2, 1, 28, 28), jnp.float32)
    params = init_params(kp)
    padded_params = pad_params(params)

    out = net_forward(x, padded_params)
    out = jax.block_until_ready(out)

    ref = reference_forward(x, params)
    assert out.shape == (2, OUT_DIM)
    # bf16 matmul inputs with f32 accumulation -> loosened tolerance vs f32 ref
    assert jnp.allclose(out, ref, atol=5e-2, rtol=5e-2), \
        float(jnp.max(jnp.abs(out - ref)))

    print("KERNEL_OK")
</pallas_src>

<mosaic_0001>
module attributes {stable_mosaic.version = 11 : i64} {
  func.func @mlp_kernel(%arg0: i32, %arg1: memref<8x784xf32, #tpu.memory_space<vmem>>, %arg2: memref<784x512xbf16, #tpu.memory_space<vmem>>, %arg3: memref<1x512xf32, #tpu.memory_space<vmem>>, %arg4: memref<512x512xbf16, #tpu.memory_space<vmem>>, %arg5: memref<1x512xf32, #tpu.memory_space<vmem>>, %arg6: memref<512x128xbf16, #tpu.memory_space<vmem>>, %arg7: memref<8x128xbf16, #tpu.memory_space<vmem>>) attributes {dimension_semantics = [#tpu.dimension_semantics<parallel>], iteration_bounds = array<i64: 1>, scalar_prefetch = 0 : i64, scratch_operands = 0 : i64, tpu.core_type = #tpu.core_type<tc>, window_params = [{transform_indices = @transform_0, window_bounds = array<i64: 8, 784>}, {pipeline_mode = #tpu.pipeline_mode<synchronous>, transform_indices = @transform_1, window_bounds = array<i64: 784, 512>}, {pipeline_mode = #tpu.pipeline_mode<synchronous>, transform_indices = @transform_2, window_bounds = array<i64: 1, 512>}, {pipeline_mode = #tpu.pipeline_mode<synchronous>, transform_indices = @transform_3, window_bounds = array<i64: 512, 512>}, {pipeline_mode = #tpu.pipeline_mode<synchronous>, transform_indices = @transform_4, window_bounds = array<i64: 1, 512>}, {pipeline_mode = #tpu.pipeline_mode<synchronous>, transform_indices = @transform_5, window_bounds = array<i64: 512, 128>}, {transform_indices = @transform_6, window_bounds = array<i64: 8, 128>}]} {
    %c0 = arith.constant 0 : index
    %c0_0 = arith.constant 0 : index
    %0 = vector.load %arg1[%c0, %c0_0] : memref<8x784xf32, #tpu.memory_space<vmem>>, vector<8x784xf32>
    %1 = arith.truncf %0 : vector<8x784xf32> to vector<8x784xbf16>
    %c0_1 = arith.constant 0 : index
    %c0_2 = arith.constant 0 : index
    %2 = vector.load %arg2[%c0_1, %c0_2] : memref<784x512xbf16, #tpu.memory_space<vmem>>, vector<784x512xbf16>
    %cst = arith.constant dense<0.000000e+00> : vector<8x512xf32>
    %3 = tpu.matmul %1, %2, %cst {dimension_numbers = #tpu.dot_dimension_numbers<[1], [0], [0], [1], [0, 0, 1, 1], [], []>} : vector<8x784xbf16>, vector<784x512xbf16>, vector<8x512xf32> -> vector<8x512xf32>
    %c0_3 = arith.constant 0 : index
    %c0_4 = arith.constant 0 : index
    %4 = vector.load %arg3[%c0_3, %c0_4] : memref<1x512xf32, #tpu.memory_space<vmem>>, vector<1x512xf32>
    %5 = vector.broadcast %4 : vector<1x512xf32> to vector<8x512xf32>
    %6 = arith.addf %3, %5 : vector<8x512xf32>
    %cst_5 = arith.constant 0.000000e+00 : f32
    %7 = vector.broadcast %cst_5 : f32 to vector<8x512xf32>
    %8 = arith.maximumf %6, %7 : vector<8x512xf32>
    %9 = arith.truncf %8 : vector<8x512xf32> to vector<8x512xbf16>
    %c0_6 = arith.constant 0 : index
    %c0_7 = arith.constant 0 : index
    %10 = vector.load %arg4[%c0_6, %c0_7] : memref<512x512xbf16, #tpu.memory_space<vmem>>, vector<512x512xbf16>
    %cst_8 = arith.constant dense<0.000000e+00> : vector<8x512xf32>
    %11 = tpu.matmul %9, %10, %cst_8 {dimension_numbers = #tpu.dot_dimension_numbers<[1], [0], [0], [1], [0, 0, 1, 1], [], []>} : vector<8x512xbf16>, vector<512x512xbf16>, vector<8x512xf32> -> vector<8x512xf32>
    %c0_9 = arith.constant 0 : index
    %c0_10 = arith.constant 0 : index
    %12 = vector.load %arg5[%c0_9, %c0_10] : memref<1x512xf32, #tpu.memory_space<vmem>>, vector<1x512xf32>
    %13 = vector.broadcast %12 : vector<1x512xf32> to vector<8x512xf32>
    %14 = arith.addf %11, %13 : vector<8x512xf32>
    %cst_11 = arith.constant 0.000000e+00 : f32
    %15 = vector.broadcast %cst_11 : f32 to vector<8x512xf32>
    %16 = arith.maximumf %14, %15 : vector<8x512xf32>
    %17 = arith.truncf %16 : vector<8x512xf32> to vector<8x512xbf16>
    %c0_12 = arith.constant 0 : index
    %c0_13 = arith.constant 0 : index
    %18 = vector.load %arg6[%c0_12, %c0_13] : memref<512x128xbf16, #tpu.memory_space<vmem>>, vector<512x128xbf16>
    %cst_14 = arith.constant dense<0.000000e+00> : vector<8x128xf32>
    %19 = tpu.matmul %17, %18, %cst_14 {dimension_numbers = #tpu.dot_dimension_numbers<[1], [0], [0], [1], [0, 0, 1, 1], [], []>} : vector<8x512xbf16>, vector<512x128xbf16>, vector<8x128xf32> -> vector<8x128xf32>
    %20 = arith.truncf %19 : vector<8x128xf32> to vector<8x128xbf16>
    %c0_15 = arith.constant 0 : index
    %c0_16 = arith.constant 0 : index
    %21 = vector.load %arg7[%c0_15, %c0_16] : memref<8x128xbf16, #tpu.memory_space<vmem>>, vector<8x128xbf16>
    tpu.vector_store %arg7[%c0_15, %c0_16], %20 {strides = array<i32>} : memref<8x128xbf16, #tpu.memory_space<vmem>>, vector<8x128xbf16>,
    return
  }
  func.func @transform_0(%arg0: i32) -> (i32, i32) {
    %c0_i32 = arith.constant 0 : i32
    %c0_i32_0 = arith.constant 0 : i32
    return %arg0, %c0_i32 : i32, i32
  }
  func.func @transform_1(%arg0: i32) -> (i32, i32) {
    %c0_i32 = arith.constant 0 : i32
    %c0_i32_0 = arith.constant 0 : i32
    %c0_i32_1 = arith.constant 0 : i32
    return %c0_i32, %c0_i32_0 : i32, i32
  }
  func.func @transform_2(%arg0: i32) -> (i32, i32) {
    %c0_i32 = arith.constant 0 : i32
    %c0_i32_0 = arith.constant 0 : i32
    %c0_i32_1 = arith.constant 0 : i32
    return %c0_i32, %c0_i32_0 : i32, i32
  }
  func.func @transform_3(%arg0: i32) -> (i32, i32) {
    %c0_i32 = arith.constant 0 : i32
    %c0_i32_0 = arith.constant 0 : i32
    %c0_i32_1 = arith.constant 0 : i32
    return %c0_i32, %c0_i32_0 : i32, i32
  }
  func.func @transform_4(%arg0: i32) -> (i32, i32) {
    %c0_i32 = arith.constant 0 : i32
    %c0_i32_0 = arith.constant 0 : i32
    %c0_i32_1 = arith.constant 0 : i32
    return %c0_i32, %c0_i32_0 : i32, i32
  }
  func.func @transform_5(%arg0: i32) -> (i32, i32) {
    %c0_i32 = arith.constant 0 : i32
    %c0_i32_0 = arith.constant 0 : i32
    %c0_i32_1 = arith.constant 0 : i32
    return %c0_i32, %c0_i32_0 : i32, i32
  }
  func.func @transform_6(%arg0: i32) -> (i32, i32) {
    %c0_i32 = arith.constant 0 : i32
    %c0_i32_0 = arith.constant 0 : i32
    return %arg0, %c0_i32 : i32, i32
  }
}

</mosaic_0001>

<llo_original>
// kernel: net_forward.1
$region0: #{net_forward.1}
  #allocation0 [shape = 'u32[]', space=smem, size = 0x4, offset = 0x4, fixed_abs, tag = 'smem constant byte address 0x4 - core index']
  #allocation1 [shape = 'u32[144,128]{1,0:T(1,128)}', space=vmem, size = 0x12000, scoped, tag = 'internal scratch']
  %s0 = inlined_call_operand.vmem [shape: f32[8,784], index: 0, kind: input, shape index: {}]
  %s1 = inlined_call_operand.hbm [shape: bf16[784,512], index: 1, kind: input, shape index: {}]
  %s2 = inlined_call_operand.vmem [shape: f32[1,512], index: 2, kind: input, shape index: {}]
  %s3 = inlined_call_operand.hbm [shape: bf16[512,512], index: 3, kind: input, shape index: {}]
  %s4 = inlined_call_operand.vmem [shape: f32[1,512], index: 4, kind: input, shape index: {}]
  %s5 = inlined_call_operand.vmem [shape: bf16[512,128], index: 5, kind: input, shape index: {}]
  %s6 = inlined_call_operand.vmem [shape: bf16[8,128], index: 6, kind: output, shape index: {}]
  %s7 = sld [smem:[#allocation0]]
  $region42: #{net_forward.1} parent=0
    _
  %s9 = ssub.s32 1, %s7
  %s10 = scalar_select 0, %s9, %s7
  $region1: #{net_forward.1} parent=0
    #allocation2 [shape = 'u8[802816]{0}', space=vmem, size = 0xc4000, scoped, tag = 'input window, operand 1, single buffered']
    #allocation3 [shape = 's32[1]{0}', space=sflag, size = 0x4, scoped, tag = 'scoped memory for net_forward.1']
    #allocation4 [shape = 'u8[524288]{0}', space=vmem, size = 0x80000, scoped, tag = 'input window, operand 3, single buffered']
    #allocation5 [shape = 's32[1]{0}', space=sflag, size = 0x4, scoped, tag = 'scoped memory for net_forward.1']
    %11 = vsyncpa [#allocation3], 0
    %12 = vsyncpa [#allocation5], 0
    // Predicated region
    $region2: #{net_forward.1} parent=1 // pred_check
      _
    $region3: #{net_forward.1} parent=1 // pred_check_branch
      %14 = sbr.rel (0) target = $region5
    $region4: #{net_forward.1} parent=1 // pred_region
      _
    $region5: #{net_forward.1} parent=1 // pred_fallthru
      _
    // Predicated region
    $region6: #{net_forward.1} parent=1 // pred_check
      _
    $region7: #{net_forward.1} parent=1 // pred_check_branch
      %16 = sbr.rel (0) target = $region9
    $region8: #{net_forward.1} parent=1 // pred_region
      %s18 = ssub.s32 25088, 25088
      %19 = vsyncadd [#allocation3], %s18
      %s20 = sshll.u32 [#allocation2], 4
      %s21 = int_to_ptr.vmem [resolvable:$true] %s20
      %26 = dma.hbm_to_vmem [thread:$0]  %s1, 25088, %s21, [#allocation3], 256, 256, 16
    $region9: #{net_forward.1} parent=1 // pred_fallthru
      _
    // Predicated region
    $region10: #{net_forward.1} parent=1 // pred_check
      _
    $region11: #{net_forward.1} parent=1 // pred_check_branch
      %28 = sbr.rel (0) target = $region13
    $region12: #{net_forward.1} parent=1 // pred_region
      _
    $region13: #{net_forward.1} parent=1 // pred_fallthru
      _
    // Predicated region
    $region14: #{net_forward.1} parent=1 // pred_check
      _
    $region15: #{net_forward.1} parent=1 // pred_check_branch
      %30 = sbr.rel (0) target = $region17
    $region16: #{net_forward.1} parent=1 // pred_region
      %s32 = ssub.s32 16384, 16384
      %33 = vsyncadd [#allocation5], %s32
      %s34 = sshll.u32 [#allocation4], 4
      %s35 = int_to_ptr.vmem [resolvable:$true] %s34
      %40 = dma.hbm_to_vmem [thread:$0]  %s3, 16384, %s35, [#allocation5], 256, 256, 16
    $region17: #{net_forward.1} parent=1 // pred_fallthru
      _
    // Predicated region
    $region18: #{net_forward.1} parent=1 // pred_check
      _
    $region19: #{net_forward.1} parent=1 // pred_check_branch
      %42 = sbr.rel (0) target = $region21
    $region20: #{net_forward.1} parent=1 // pred_region
      _
    $region21: #{net_forward.1} parent=1 // pred_fallthru
      _
    // Predicated region
    $region22: #{net_forward.1} parent=1 // pred_check
      _
    $region23: #{net_forward.1} parent=1 // pred_check_branch
      %44 = sbr.rel (0) target = $region25
    $region24: #{net_forward.1} parent=1 // pred_region
      _
    $region25: #{net_forward.1} parent=1 // pred_fallthru
      _
    // Predicated region
    $region26: #{net_forward.1} parent=1 // pred_check
      _
    $region27: #{net_forward.1} parent=1 // pred_check_branch
      %46 = sbr.rel (0) target = $region29
    $region28: #{net_forward.1} parent=1 // pred_region
      %47 = dma.done [#allocation3], 25088
    $region29: #{net_forward.1} parent=1 // pred_fallthru
      _
    // Predicated region
    $region30: #{net_forward.1} parent=1 // pred_check
      _
    $region31: #{net_forward.1} parent=1 // pred_check_branch
      %49 = sbr.rel (0) target = $region33
    $region32: #{net_forward.1} parent=1 // pred_region
      %50 = dma.done [#allocation5], 16384
    $region33: #{net_forward.1} parent=1 // pred_fallthru
      _
    %v52 = vld [vmem:[%s0] sm:$0xff]
    %v53 = vld [vmem:[%s0 + $0x8] sm:$0xff]
    %v54 = vld [vmem:[%s0 + $0x10] sm:$0xff]
    %v55 = vld [vmem:[%s0 + $0x18] sm:$0xff]
    %v56 = vld [vmem:[%s0 + $0x20] sm:$0xff]
    %v57 = vld [vmem:[%s0 + $0x28] sm:$0xff]
    %v58 = vld [vmem:[%s0 + $0x30] sm:$0xff]
    %v59 = vpack.c.bf16 %v52, %v52
    %v60 = vpack.c.bf16 %v53, %v53
    %v61 = vpack.c.bf16 %v54, %v54
    %v62 = vpack.c.bf16 %v55, %v55
    %v63 = vpack.c.bf16 %v56, %v56
    %v64 = vpack.c.bf16 %v57, %v57
    %v65 = vpack.c.bf16 %v58, %v58
    %v66 = vld [vmem:[#allocation2] sm:$0xff]
    %v67 = vld [vmem:[#allocation2 + $0x8] sm:$0xff]
    %v68 = vld [vmem:[#allocation2 + $0x10] sm:$0xff]
    %v69 = vld [vmem:[#allocation2 + $0x18] sm:$0xff]
    %v70 = vld [vmem:[#allocation2 + $0x20] sm:$0xff]
    %v71 = vld [vmem:[#allocation2 + $0x28] sm:$0xff]
    %v72 = vld [vmem:[#allocation2 + $0x30] sm:$0xff]
    %v73 = vld [vmem:[#allocation2 + $0x38] sm:$0xff]
    %v74 = vld [vmem:[#allocation2 + $0x40] sm:$0xff]
    %v75 = vld [vmem:[#allocation2 + $0x48] sm:$0xff]
    %v76 = vld [vmem:[#allocation2 + $0x50] sm:$0xff]
    %v77 = vld [vmem:[#allocation2 + $0x58] sm:$0xff]
    %v78 = vld [vmem:[#allocation2 + $0x60] sm:$0xff]
    %v79 = vld [vmem:[#allocation2 + $0x68] sm:$0xff]
    %v80 = vld [vmem:[#allocation2 + $0x70] sm:$0xff]
    %v81 = vld [vmem:[#allocation2 + $0x78] sm:$0xff]
    %v82 = vld [vmem:[#allocation2 + $0x80] sm:$0xff]
    %v83 = vld [vmem:[#allocation2 + $0x88] sm:$0xff]
    %v84 = vld [vmem:[#allocation2 + $0x90] sm:$0xff]
    %v85 = vld [vmem:[#allocation2 + $0x98] sm:$0xff]
    %v86 = vld [vmem:[#allocation2 + $0xa0] sm:$0xff]
    %v87 = vld [vmem:[#allocation2 + $0xa8] sm:$0xff]
    %v88 = vld [vmem:[#allocation2 + $0xb0] sm:$0xff]
    %v89 = vld [vmem:[#allocation2 + $0xb8] sm:$0xff]
    %v90 = vld [vmem:[#allocation2 + $0xc0] sm:$0xff]
    %v91 = vld [vmem:[#allocation2 + $0xc8] sm:$0xff]
    %v92 = vld [vmem:[#allocation2 + $0xd0] sm:$0xff]
    %v93 = vld [vmem:[#allocation2 + $0xd8] sm:$0xff]
    %v94 = vld [vmem:[#allocation2 + $0xe0] sm:$0xff]
    %v95 = vld [vmem:[#allocation2 + $0xe8] sm:$0xff]
    %v96 = vld [vmem:[#allocation2 + $0xf0] sm:$0xff]
    %v97 = vld [vmem:[#allocation2 + $0xf8] sm:$0xff]
    %v98 = vld [vmem:[#allocation2 + $0x100] sm:$0xff]
    %v99 = vld [vmem:[#allocation2 + $0x108] sm:$0xff]
    %v100 = vld [vmem:[#allocation2 + $0x110] sm:$0xff]
    %v101 = vld [vmem:[#allocation2 + $0x118] sm:$0xff]
    %v102 = vld [vmem:[#allocation2 + $0x120] sm:$0xff]
    %v103 = vld [vmem:[#allocation2 + $0x128] sm:$0xff]
    %v104 = vld [vmem:[#allocation2 + $0x130] sm:$0xff]
    %v105 = vld [vmem:[#allocation2 + $0x138] sm:$0xff]
    %v106 = vld [vmem:[#allocation2 + $0x140] sm:$0xff]
    %v107 = vld [vmem:[#allocation2 + $0x148] sm:$0xff]
    %v108 = vld [vmem:[#allocation2 + $0x150] sm:$0xff]
    %v109 = vld [vmem:[#allocation2 + $0x158] sm:$0xff]
    %v110 = vld [vmem:[#allocation2 + $0x160] sm:$0xff]
    %v111 = vld [vmem:[#allocation2 + $0x168] sm:$0xff]
    %v112 = vld [vmem:[#allocation2 + $0x170] sm:$0xff]
    %v113 = vld [vmem:[#allocation2 + $0x178] sm:$0xff]
    %v114 = vld [vmem:[#allocation2 + $0x180] sm:$0xff]
    %v115 = vld [vmem:[#allocation2 + $0x188] sm:$0xff]
    %v116 = vld [vmem:[#allocation2 + $0x190] sm:$0xff]
    %v117 = vld [vmem:[#allocation2 + $0x198] sm:$0xff]
    %v118 = vld [vmem:[#allocation2 + $0x1a0] sm:$0xff]
    %v119 = vld [vmem:[#allocation2 + $0x1a8] sm:$0xff]
    %v120 = vld [vmem:[#allocation2 + $0x1b0] sm:$0xff]
    %v121 = vld [vmem:[#allocation2 + $0x1b8] sm:$0xff]
    %v122 = vld [vmem:[#allocation2 + $0x1c0] sm:$0xff]
    %v123 = vld [vmem:[#allocation2 + $0x1c8] sm:$0xff]
    %v124 = vld [vmem:[#allocation2 + $0x1d0] sm:$0xff]
    %v125 = vld [vmem:[#allocation2 + $0x1d8] sm:$0xff]
    %v126 = vld [vmem:[#allocation2 + $0x1e0] sm:$0xff]
    %v127 = vld [vmem:[#allocation2 + $0x1e8] sm:$0xff]
    %v128 = vld [vmem:[#allocation2 + $0x1f0] sm:$0xff]
    %v129 = vld [vmem:[#allocation2 + $0x1f8] sm:$0xff]
    %v130 = vld [vmem:[#allocation2 + $0x200] sm:$0xff]
    %v131 = vld [vmem:[#allocation2 + $0x208] sm:$0xff]
    %v132 = vld [vmem:[#allocation2 + $0x210] sm:$0xff]
    %v133 = vld [vmem:[#allocation2 + $0x218] sm:$0xff]
    %v134 = vld [vmem:[#allocation2 + $0x220] sm:$0xff]
    %v135 = vld [vmem:[#allocation2 + $0x228] sm:$0xff]
    %v136 = vld [vmem:[#allocation2 + $0x230] sm:$0xff]
    %v137 = vld [vmem:[#allocation2 + $0x238] sm:$0xff]
    %v138 = vld [vmem:[#allocation2 + $0x240] sm:$0xff]
    %v139 = vld [vmem:[#allocation2 + $0x248] sm:$0xff]
    %v140 = vld [vmem:[#allocation2 + $0x250] sm:$0xff]
    %v141 = vld [vmem:[#allocation2 + $0x258] sm:$0xff]
    %v142 = vld [vmem:[#allocation2 + $0x260] sm:$0xff]
    %v143 = vld [vmem:[#allocation2 + $0x268] sm:$0xff]
    %v144 = vld [vmem:[#allocation2 + $0x270] sm:$0xff]
    %v145 = vld [vmem:[#allocation2 + $0x278] sm:$0xff]
    %v146 = vld [vmem:[#allocation2 + $0x280] sm:$0xff]
    %v147 = vld [vmem:[#allocation2 + $0x288] sm:$0xff]
    %v148 = vld [vmem:[#allocation2 + $0x290] sm:$0xff]
    %v149 = vld [vmem:[#allocation2 + $0x298] sm:$0xff]
    %v150 = vld [vmem:[#allocation2 + $0x2a0] sm:$0xff]
    %v151 = vld [vmem:[#allocation2 + $0x2a8] sm:$0xff]
    %v152 = vld [vmem:[#allocation2 + $0x2b0] sm:$0xff]
    %v153 = vld [vmem:[#allocation2 + $0x2b8] sm:$0xff]
    %v154 = vld [vmem:[#allocation2 + $0x2c0] sm:$0xff]
    %v155 = vld [vmem:[#allocation2 + $0x2c8] sm:$0xff]
    %v156 = vld [vmem:[#allocation2 + $0x2d0] sm:$0xff]
    %v157 = vld [vmem:[#allocation2 + $0x2d8] sm:$0xff]
    %v158 = vld [vmem:[#allocation2 + $0x2e0] sm:$0xff]
    %v159 = vld [vmem:[#allocation2 + $0x2e8] sm:$0xff]
    %v160 = vld [vmem:[#allocation2 + $0x2f0] sm:$0xff]
    %v161 = vld [vmem:[#allocation2 + $0x2f8] sm:$0xff]
    %v162 = vld [vmem:[#allocation2 + $0x300] sm:$0xff]
    %v163 = vld [vmem:[#allocation2 + $0x308] sm:$0xff]
    %v164 = vld [vmem:[#allocation2 + $0x310] sm:$0xff]
    %v165 = vld [vmem:[#allocation2 + $0x318] sm:$0xff]
    %v166 = vld [vmem:[#allocation2 + $0x320] sm:$0xff]
    %v167 = vld [vmem:[#allocation2 + $0x328] sm:$0xff]
    %v168 = vld [vmem:[#allocation2 + $0x330] sm:$0xff]
    %v169 = vld [vmem:[#allocation2 + $0x338] sm:$0xff]
    %v170 = vld [vmem:[#allocation2 + $0x340] sm:$0xff]
    %v171 = vld [vmem:[#allocation2 + $0x348] sm:$0xff]
    %v172 = vld [vmem:[#allocation2 + $0x350] sm:$0xff]
    %v173 = vld [vmem:[#allocation2 + $0x358] sm:$0xff]
    %v174 = vld [vmem:[#allocation2 + $0x360] sm:$0xff]
    %v175 = vld [vmem:[#allocation2 + $0x368] sm:$0xff]
    %v176 = vld [vmem:[#allocation2 + $0x370] sm:$0xff]
    %v177 = vld [vmem:[#allocation2 + $0x378] sm:$0xff]
    %v178 = vld [vmem:[#allocation2 + $0x380] sm:$0xff]
    %v179 = vld [vmem:[#allocation2 + $0x388] sm:$0xff]
    %v180 = vld [vmem:[#allocation2 + $0x390] sm:$0xff]
    %v181 = vld [vmem:[#allocation2 + $0x398] sm:$0xff]
    %v182 = vld [vmem:[#allocation2 + $0x3a0] sm:$0xff]
    %v183 = vld [vmem:[#allocation2 + $0x3a8] sm:$0xff]
    %v184 = vld [vmem:[#allocation2 + $0x3b0] sm:$0xff]
    %v185 = vld [vmem:[#allocation2 + $0x3b8] sm:$0xff]
    %v186 = vld [vmem:[#allocation2 + $0x3c0] sm:$0xff]
    %v187 = vld [vmem:[#allocation2 + $0x3c8] sm:$0xff]
    %v188 = vld [vmem:[#allocation2 + $0x3d0] sm:$0xff]
    %v189 = vld [vmem:[#allocation2 + $0x3d8] sm:$0xff]
    %v190 = vld [vmem:[#allocation2 + $0x3e0] sm:$0xff]
    %v191 = vld [vmem:[#allocation2 + $0x3e8] sm:$0xff]
    %v192 = vld [vmem:[#allocation2 + $0x3f0] sm:$0xff]
    %v193 = vld [vmem:[#allocation2 + $0x3f8] sm:$0xff]
    %v194 = vld [vmem:[#allocation2 + $0x400] sm:$0xff]
    %v195 = vld [vmem:[#allocation2 + $0x408] sm:$0xff]
    %v196 = vld [vmem:[#allocation2 + $0x410] sm:$0xff]
    %v197 = vld [vmem:[#allocation2 + $0x418] sm:$0xff]
    %v198 = vld [vmem:[#allocation2 + $0x420] sm:$0xff]
    %v199 = vld [vmem:[#allocation2 + $0x428] sm:$0xff]
    %v200 = vld [vmem:[#allocation2 + $0x430] sm:$0xff]
    %v201 = vld [vmem:[#allocation2 + $0x438] sm:$0xff]
    %v202 = vld [vmem:[#allocation2 + $0x440] sm:$0xff]
    %v203 = vld [vmem:[#allocation2 + $0x448] sm:$0xff]
    %v204 = vld [vmem:[#allocation2 + $0x450] sm:$0xff]
    %v205 = vld [vmem:[#allocation2 + $0x458] sm:$0xff]
    %v206 = vld [vmem:[#allocation2 + $0x460] sm:$0xff]
    %v207 = vld [vmem:[#allocation2 + $0x468] sm:$0xff]
    %v208 = vld [vmem:[#allocation2 + $0x470] sm:$0xff]
    %v209 = vld [vmem:[#allocation2 + $0x478] sm:$0xff]
    %v210 = vld [vmem:[#allocation2 + $0x480] sm:$0xff]
    %v211 = vld [vmem:[#allocation2 + $0x488] sm:$0xff]
    %v212 = vld [vmem:[#allocation2 + $0x490] sm:$0xff]
    %v213 = vld [vmem:[#allocation2 + $0x498] sm:$0xff]
    %v214 = vld [vmem:[#allocation2 + $0x4a0] sm:$0xff]
    %v215 = vld [vmem:[#allocation2 + $0x4a8] sm:$0xff]
    %v216 = vld [vmem:[#allocation2 + $0x4b0] sm:$0xff]
    %v217 = vld [vmem:[#allocation2 + $0x4b8] sm:$0xff]
    %v218 = vld [vmem:[#allocation2 + $0x4c0] sm:$0xff]
    %v219 = vld [vmem:[#allocation2 + $0x4c8] sm:$0xff]
    %v220 = vld [vmem:[#allocation2 + $0x4d0] sm:$0xff]
    %v221 = vld [vmem:[#allocation2 + $0x4d8] sm:$0xff]
    %v222 = vld [vmem:[#allocation2 + $0x4e0] sm:$0xff]
    %v223 = vld [vmem:[#allocation2 + $0x4e8] sm:$0xff]
    %v224 = vld [vmem:[#allocation2 + $0x4f0] sm:$0xff]
    %v225 = vld [vmem:[#allocation2 + $0x4f8] sm:$0xff]
    %v226 = vld [vmem:[#allocation2 + $0x500] sm:$0xff]
    %v227 = vld [vmem:[#allocation2 + $0x508] sm:$0xff]
    %v228 = vld [vmem:[#allocation2 + $0x510] sm:$0xff]
    %v229 = vld [vmem:[#allocation2 + $0x518] sm:$0xff]
    %v230 = vld [vmem:[#allocation2 + $0x520] sm:$0xff]
    %v231 = vld [vmem:[#allocation2 + $0x528] sm:$0xff]
    %v232 = vld [vmem:[#allocation2 + $0x530] sm:$0xff]
    %v233 = vld [vmem:[#allocation2 + $0x538] sm:$0xff]
    %v234 = vld [vmem:[#allocation2 + $0x540] sm:$0xff]
    %v235 = vld [vmem:[#allocation2 + $0x548] sm:$0xff]
    %v236 = vld [vmem:[#allocation2 + $0x550] sm:$0xff]
    %v237 = vld [vmem:[#allocation2 + $0x558] sm:$0xff]
    %v238 = vld [vmem:[#allocation2 + $0x560] sm:$0xff]
    %v239 = vld [vmem:[#allocation2 + $0x568] sm:$0xff]
    %v240 = vld [vmem:[#allocation2 + $0x570] sm:$0xff]
    %v241 = vld [vmem:[#allocation2 + $0x578] sm:$0xff]
    %v242 = vld [vmem:[#allocation2 + $0x580] sm:$0xff]
    %v243 = vld [vmem:[#allocation2 + $0x588] sm:$0xff]
    %v244 = vld [vmem:[#allocation2 + $0x590] sm:$0xff]
    %v245 = vld [vmem:[#allocation2 + $0x598] sm:$0xff]
    %v246 = vld [vmem:[#allocation2 + $0x5a0] sm:$0xff]
    %v247 = vld [vmem:[#allocation2 + $0x5a8] sm:$0xff]
    %v248 = vld [vmem:[#allocation2 + $0x5b0] sm:$0xff]
    %v249 = vld [vmem:[#allocation2 + $0x5b8] sm:$0xff]
    %v250 = vld [vmem:[#allocation2 + $0x5c0] sm:$0xff]
    %v251 = vld [vmem:[#allocation2 + $0x5c8] sm:$0xff]
    %v252 = vld [vmem:[#allocation2 + $0x5d0] sm:$0xff]
    %v253 = vld [vmem:[#allocation2 + $0x5d8] sm:$0xff]
    %v254 = vld [vmem:[#allocation2 + $0x5e0] sm:$0xff]
    %v255 = vld [vmem:[#allocation2 + $0x5e8] sm:$0xff]
    %v256 = vld [vmem:[#allocation2 + $0x5f0] sm:$0xff]
    %v257 = vld [vmem:[#allocation2 + $0x5f8] sm:$0xff]
    %v258 = vld [vmem:[#allocation2 + $0x600] sm:$0xff]
    %v259 = vld [vmem:[#allocation2 + $0x608] sm:$0xff]
    %v260 = vld [vmem:[#allocation2 + $0x610] sm:$0xff]
    %v261 = vld [vmem:[#allocation2 + $0x618] sm:$0xff]
    %v262 = vld [vmem:[%s2] sm:$0xf]
    %v264 = vlaneseq
    %v265 = vshrl.u32 %v264, 7
    %v266 = vsub.s32 0, %v265
    %v267 = vrot.slane %v262, %v266
    %v268 = vlaneseq
    %v269 = vshrl.u32 %v268, 7
    %v270 = vsub.s32 1, %v269
    %v271 = vrot.slane %v262, %v270
    %v272 = vlaneseq
    %v273 = vshrl.u32 %v272, 7
    %v274 = vsub.s32 2, %v273
    %v275 = vrot.slane %v262, %v274
    %v276 = vlaneseq
    %v277 = vshrl.u32 %v276, 7
    %v278 = vsub.s32 3, %v277
    %v279 = vrot.slane %v262, %v278
    %v480 = vunpack.c.l.b16 %v66
    %v481 = vunpack.c.h.b16 %v66
    %v482 = vunpack.c.l.b16 %v67
    %v483 = vunpack.c.h.b16 %v67
    %v484 = vunpack.c.l.b16 %v68
    %v485 = vunpack.c.h.b16 %v68
    %v486 = vunpack.c.l.b16 %v69
    %v487 = vunpack.c.h.b16 %v69
    %v488 = vunpack.c.l.b16 %v70
    %v489 = vunpack.c.h.b16 %v70
    %v490 = vunpack.c.l.b16 %v71
    %v491 = vunpack.c.h.b16 %v71
    %v492 = vunpack.c.l.b16 %v72
    %v493 = vunpack.c.h.b16 %v72
    %v494 = vunpack.c.l.b16 %v73
    %v495 = vunpack.c.h.b16 %v73
    %v496 = vunpack.c.l.b16 %v74
    %v497 = vunpack.c.h.b16 %v74
    %v498 = vunpack.c.l.b16 %v75
    %v499 = vunpack.c.h.b16 %v75
    %v500 = vunpack.c.l.b16 %v76
    %v501 = vunpack.c.h.b16 %v76
    %v502 = vunpack.c.l.b16 %v77
    %v503 = vunpack.c.h.b16 %v77
    %v504 = vunpack.c.l.b16 %v78
    %v505 = vunpack.c.h.b16 %v78
    %v506 = vunpack.c.l.b16 %v79
    %v507 = vunpack.c.h.b16 %v79
    %v508 = vunpack.c.l.b16 %v80
    %v509 = vunpack.c.h.b16 %v80
    %v510 = vunpack.c.l.b16 %v81
    %v511 = vunpack.c.h.b16 %v81
    %v512 = vunpack.c.l.b16 %v82
    %v513 = vunpack.c.h.b16 %v82
    %v514 = vunpack.c.l.b16 %v83
    %v515 = vunpack.c.h.b16 %v83
    %v516 = vunpack.c.l.b16 %v84
    %v517 = vunpack.c.h.b16 %v84
    %v518 = vunpack.c.l.b16 %v85
    %v519 = vunpack.c.h.b16 %v85
    %v520 = vunpack.c.l.b16 %v86
    %v521 = vunpack.c.h.b16 %v86
    %v522 = vunpack.c.l.b16 %v87
    %v523 = vunpack.c.h.b16 %v87
    %v524 = vunpack.c.l.b16 %v88
    %v525 = vunpack.c.h.b16 %v88
    %v526 = vunpack.c.l.b16 %v89
    %v527 = vunpack.c.h.b16 %v89
    %v528 = vunpack.c.l.b16 %v90
    %v529 = vunpack.c.h.b16 %v90
    %v530 = vunpack.c.l.b16 %v91
    %v531 = vunpack.c.h.b16 %v91
    %v532 = vunpack.c.l.b16 %v92
    %v533 = vunpack.c.h.b16 %v92
    %v534 = vunpack.c.l.b16 %v93
    %v535 = vunpack.c.h.b16 %v93
    %v536 = vunpack.c.l.b16 %v94
    %v537 = vunpack.c.h.b16 %v94
    %v538 = vunpack.c.l.b16 %v95
    %v539 = vunpack.c.h.b16 %v95
    %v540 = vunpack.c.l.b16 %v96
    %v541 = vunpack.c.h.b16 %v96
    %v542 = vunpack.c.l.b16 %v97
    %v543 = vunpack.c.h.b16 %v97
    %v544 = vunpack.c.l.b16 %v98
    %v545 = vunpack.c.h.b16 %v98
    %v546 = vunpack.c.l.b16 %v99
    %v547 = vunpack.c.h.b16 %v99
    %v548 = vunpack.c.l.b16 %v100
    %v549 = vunpack.c.h.b16 %v100
    %v550 = vunpack.c.l.b16 %v101
    %v551 = vunpack.c.h.b16 %v101
    %v552 = vunpack.c.l.b16 %v102
    %v553 = vunpack.c.h.b16 %v102
    %v554 = vunpack.c.l.b16 %v103
    %v555 = vunpack.c.h.b16 %v103
    %v556 = vunpack.c.l.b16 %v104
    %v557 = vunpack.c.h.b16 %v104
    %v558 = vunpack.c.l.b16 %v105
    %v559 = vunpack.c.h.b16 %v105
    %v560 = vunpack.c.l.b16 %v106
    %v561 = vunpack.c.h.b16 %v106
    %v562 = vunpack.c.l.b16 %v107
    %v563 = vunpack.c.h.b16 %v107
    %v564 = vunpack.c.l.b16 %v108
    %v565 = vunpack.c.h.b16 %v108
    %v566 = vunpack.c.l.b16 %v109
    %v567 = vunpack.c.h.b16 %v109
    %v568 = vunpack.c.l.b16 %v110
    %v569 = vunpack.c.h.b16 %v110
    %v570 = vunpack.c.l.b16 %v111
    %v571 = vunpack.c.h.b16 %v111
    %v572 = vunpack.c.l.b16 %v112
    %v573 = vunpack.c.h.b16 %v112
    %v574 = vunpack.c.l.b16 %v113
    %v575 = vunpack.c.h.b16 %v113
    %v576 = vunpack.c.l.b16 %v114
    %v577 = vunpack.c.h.b16 %v114
    %v578 = vunpack.c.l.b16 %v115
    %v579 = vunpack.c.h.b16 %v115
    %v580 = vunpack.c.l.b16 %v116
    %v581 = vunpack.c.h.b16 %v116
    %v582 = vunpack.c.l.b16 %v117
    %v583 = vunpack.c.h.b16 %v117
    %v584 = vunpack.c.l.b16 %v118
    %v585 = vunpack.c.h.b16 %v118
    %v586 = vunpack.c.l.b16 %v119
    %v587 = vunpack.c.h.b16 %v119
    %v588 = vunpack.c.l.b16 %v120
    %v589 = vunpack.c.h.b16 %v120
    %v590 = vunpack.c.l.b16 %v121
    %v591 = vunpack.c.h.b16 %v121
    %v592 = vunpack.c.l.b16 %v122
    %v593 = vunpack.c.h.b16 %v122
    %v594 = vunpack.c.l.b16 %v123
    %v595 = vunpack.c.h.b16 %v123
    %v596 = vunpack.c.l.b16 %v124
    %v597 = vunpack.c.h.b16 %v124
    %v598 = vunpack.c.l.b16 %v125
    %v599 = vunpack.c.h.b16 %v125
    %v600 = vunpack.c.l.b16 %v126
    %v601 = vunpack.c.h.b16 %v126
    %v602 = vunpack.c.l.b16 %v127
    %v603 = vunpack.c.h.b16 %v127
    %v604 = vunpack.c.l.b16 %v128
    %v605 = vunpack.c.h.b16 %v128
    %v606 = vunpack.c.l.b16 %v129
    %v607 = vunpack.c.h.b16 %v129
    %v608 = vunpack.c.l.b16 %v130
    %v609 = vunpack.c.h.b16 %v130
    %v610 = vunpack.c.l.b16 %v131
    %v611 = vunpack.c.h.b16 %v131
    %v612 = vunpack.c.l.b16 %v132
    %v613 = vunpack.c.h.b16 %v132
    %v614 = vunpack.c.l.b16 %v133
    %v615 = vunpack.c.h.b16 %v133
    %v616 = vunpack.c.l.b16 %v134
    %v617 = vunpack.c.h.b16 %v134
    %v618 = vunpack.c.l.b16 %v135
    %v619 = vunpack.c.h.b16 %v135
    %v620 = vunpack.c.l.b16 %v136
    %v621 = vunpack.c.h.b16 %v136
    %v622 = vunpack.c.l.b16 %v137
    %v623 = vunpack.c.h.b16 %v137
    %v624 = vunpack.c.l.b16 %v138
    %v625 = vunpack.c.h.b16 %v138
    %v626 = vunpack.c.l.b16 %v139
    %v627 = vunpack.c.h.b16 %v139
    %v628 = vunpack.c.l.b16 %v140
    %v629 = vunpack.c.h.b16 %v140
    %v630 = vunpack.c.l.b16 %v141
    %v631 = vunpack.c.h.b16 %v141
    %v632 = vunpack.c.l.b16 %v142
    %v633 = vunpack.c.h.b16 %v142
    %v634 = vunpack.c.l.b16 %v143
    %v635 = vunpack.c.h.b16 %v143
    %v636 = vunpack.c.l.b16 %v144
    %v637 = vunpack.c.h.b16 %v144
    %v638 = vunpack.c.l.b16 %v145
    %v639 = vunpack.c.h.b16 %v145
    %v640 = vunpack.c.l.b16 %v146
    %v641 = vunpack.c.h.b16 %v146
    %v642 = vunpack.c.l.b16 %v147
    %v643 = vunpack.c.h.b16 %v147
    %v644 = vunpack.c.l.b16 %v148
    %v645 = vunpack.c.h.b16 %v148
    %v646 = vunpack.c.l.b16 %v149
    %v647 = vunpack.c.h.b16 %v149
    %v648 = vunpack.c.l.b16 %v150
    %v649 = vunpack.c.h.b16 %v150
    %v650 = vunpack.c.l.b16 %v151
    %v651 = vunpack.c.h.b16 %v151
    %v652 = vunpack.c.l.b16 %v152
    %v653 = vunpack.c.h.b16 %v152
    %v654 = vunpack.c.l.b16 %v153
    %v655 = vunpack.c.h.b16 %v153
    %v656 = vunpack.c.l.b16 %v154
    %v657 = vunpack.c.h.b16 %v154
    %v658 = vunpack.c.l.b16 %v155
    %v659 = vunpack.c.h.b16 %v155
    %v660 = vunpack.c.l.b16 %v156
    %v661 = vunpack.c.h.b16 %v156
    %v662 = vunpack.c.l.b16 %v157
    %v663 = vunpack.c.h.b16 %v157
    %v664 = vunpack.c.l.b16 %v158
    %v665 = vunpack.c.h.b16 %v158
    %v666 = vunpack.c.l.b16 %v159
    %v667 = vunpack.c.h.b16 %v159
    %v668 = vunpack.c.l.b16 %v160
    %v669 = vunpack.c.h.b16 %v160
    %v670 = vunpack.c.l.b16 %v161
    %v671 = vunpack.c.h.b16 %v161
    %v672 = vunpack.c.l.b16 %v162
    %v673 = vunpack.c.h.b16 %v162
    %v674 = vunpack.c.l.b16 %v163
    %v675 = vunpack.c.h.b16 %v163
    %v676 = vunpack.c.l.b16 %v164
    %v677 = vunpack.c.h.b16 %v164
    %v678 = vunpack.c.l.b16 %v165
    %v679 = vunpack.c.h.b16 %v165
    %v680 = vunpack.c.l.b16 %v166
    %v681 = vunpack.c.h.b16 %v166
    %v682 = vunpack.c.l.b16 %v167
    %v683 = vunpack.c.h.b16 %v167
    %v684 = vunpack.c.l.b16 %v168
    %v685 = vunpack.c.h.b16 %v168
    %v686 = vunpack.c.l.b16 %v169
    %v687 = vunpack.c.h.b16 %v169
    %v688 = vunpack.c.l.b16 %v170
    %v689 = vunpack.c.h.b16 %v170
    %v690 = vunpack.c.l.b16 %v171
    %v691 = vunpack.c.h.b16 %v171
    %v692 = vunpack.c.l.b16 %v172
    %v693 = vunpack.c.h.b16 %v172
    %v694 = vunpack.c.l.b16 %v173
    %v695 = vunpack.c.h.b16 %v173
    %v696 = vunpack.c.l.b16 %v174
    %v697 = vunpack.c.h.b16 %v174
    %v698 = vunpack.c.l.b16 %v175
    %v699 = vunpack.c.h.b16 %v175
    %v700 = vunpack.c.l.b16 %v176
    %v701 = vunpack.c.h.b16 %v176
    %v702 = vunpack.c.l.b16 %v177
    %v703 = vunpack.c.h.b16 %v177
    %v704 = vunpack.c.l.b16 %v178
    %v705 = vunpack.c.h.b16 %v178
    %v706 = vunpack.c.l.b16 %v179
    %v707 = vunpack.c.h.b16 %v179
    %v708 = vunpack.c.l.b16 %v180
    %v709 = vunpack.c.h.b16 %v180
    %v710 = vunpack.c.l.b16 %v181
    %v711 = vunpack.c.h.b16 %v181
    %v712 = vunpack.c.l.b16 %v182
    %v713 = vunpack.c.h.b16 %v182
    %v714 = vunpack.c.l.b16 %v183
    %v715 = vunpack.c.h.b16 %v183
    %v716 = vunpack.c.l.b16 %v184
    %v717 = vunpack.c.h.b16 %v184
    %v718 = vunpack.c.l.b16 %v185
    %v719 = vunpack.c.h.b16 %v185
    %v720 = vunpack.c.l.b16 %v186
    %v721 = vunpack.c.h.b16 %v186
    %v722 = vunpack.c.l.b16 %v187
    %v723 = vunpack.c.h.b16 %v187
    %v724 = vunpack.c.l.b16 %v188
    %v725 = vunpack.c.h.b16 %v188
    %v726 = vunpack.c.l.b16 %v189
    %v727 = vunpack.c.h.b16 %v189
    %v728 = vunpack.c.l.b16 %v190
    %v729 = vunpack.c.h.b16 %v190
    %v730 = vunpack.c.l.b16 %v191
    %v731 = vunpack.c.h.b16 %v191
    %v732 = vunpack.c.l.b16 %v192
    %v733 = vunpack.c.h.b16 %v192
    %v734 = vunpack.c.l.b16 %v193
    %v735 = vunpack.c.h.b16 %v193
    %v736 = vunpack.c.l.b16 %v194
    %v737 = vunpack.c.h.b16 %v194
    %v738 = vunpack.c.l.b16 %v195
    %v739 = vunpack.c.h.b16 %v195
    %v740 = vunpack.c.l.b16 %v196
    %v741 = vunpack.c.h.b16 %v196
    %v742 = vunpack.c.l.b16 %v197
    %v743 = vunpack.c.h.b16 %v197
    %v744 = vunpack.c.l.b16 %v198
    %v745 = vunpack.c.h.b16 %v198
    %v746 = vunpack.c.l.b16 %v199
    %v747 = vunpack.c.h.b16 %v199
    %v748 = vunpack.c.l.b16 %v200
    %v749 = vunpack.c.h.b16 %v200
    %v750 = vunpack.c.l.b16 %v201
    %v751 = vunpack.c.h.b16 %v201
    %v752 = vunpack.c.l.b16 %v202
    %v753 = vunpack.c.h.b16 %v202
    %v754 = vunpack.c.l.b16 %v203
    %v755 = vunpack.c.h.b16 %v203
    %v756 = vunpack.c.l.b16 %v204
    %v757 = vunpack.c.h.b16 %v204
    %v758 = vunpack.c.l.b16 %v205
    %v759 = vunpack.c.h.b16 %v205
    %v760 = vunpack.c.l.b16 %v206
    %v761 = vunpack.c.h.b16 %v206
    %v762 = vunpack.c.l.b16 %v207
    %v763 = vunpack.c.h.b16 %v207
    %v764 = vunpack.c.l.b16 %v208
    %v765 = vunpack.c.h.b16 %v208
    %v766 = vunpack.c.l.b16 %v209
    %v767 = vunpack.c.h.b16 %v209
    %v768 = vunpack.c.l.b16 %v210
    %v769 = vunpack.c.h.b16 %v210
    %v770 = vunpack.c.l.b16 %v211
    %v771 = vunpack.c.h.b16 %v211
    %v772 = vunpack.c.l.b16 %v212
    %v773 = vunpack.c.h.b16 %v212
    %v774 = vunpack.c.l.b16 %v213
    %v775 = vunpack.c.h.b16 %v213
    %v776 = vunpack.c.l.b16 %v214
    %v777 = vunpack.c.h.b16 %v214
    %v778 = vunpack.c.l.b16 %v215
    %v779 = vunpack.c.h.b16 %v215
    %v780 = vunpack.c.l.b16 %v216
    %v781 = vunpack.c.h.b16 %v216
    %v782 = vunpack.c.l.b16 %v217
    %v783 = vunpack.c.h.b16 %v217
    %v784 = vunpack.c.l.b16 %v218
    %v785 = vunpack.c.h.b16 %v218
    %v786 = vunpack.c.l.b16 %v219
    %v787 = vunpack.c.h.b16 %v219
    %v788 = vunpack.c.l.b16 %v220
    %v789 = vunpack.c.h.b16 %v220
    %v790 = vunpack.c.l.b16 %v221
    %v791 = vunpack.c.h.b16 %v221
    %v792 = vunpack.c.l.b16 %v222
    %v793 = vunpack.c.h.b16 %v222
    %v794 = vunpack.c.l.b16 %v223
    %v795 = vunpack.c.h.b16 %v223
    %v796 = vunpack.c.l.b16 %v224
    %v797 = vunpack.c.h.b16 %v224
    %v798 = vunpack.c.l.b16 %v225
    %v799 = vunpack.c.h.b16 %v225
    %v800 = vunpack.c.l.b16 %v226
    %v801 = vunpack.c.h.b16 %v226
    %v802 = vunpack.c.l.b16 %v227
    %v803 = vunpack.c.h.b16 %v227
    %v804 = vunpack.c.l.b16 %v228
    %v805 = vunpack.c.h.b16 %v228
    %v806 = vunpack.c.l.b16 %v229
    %v807 = vunpack.c.h.b16 %v229
    %v808 = vunpack.c.l.b16 %v230
    %v809 = vunpack.c.h.b16 %v230
    %v810 = vunpack.c.l.b16 %v231
    %v811 = vunpack.c.h.b16 %v231
    %v812 = vunpack.c.l.b16 %v232
    %v813 = vunpack.c.h.b16 %v232
    %v814 = vunpack.c.l.b16 %v233
    %v815 = vunpack.c.h.b16 %v233
    %v816 = vunpack.c.l.b16 %v234
    %v817 = vunpack.c.h.b16 %v234
    %v818 = vunpack.c.l.b16 %v235
    %v819 = vunpack.c.h.b16 %v235
    %v820 = vunpack.c.l.b16 %v236
    %v821 = vunpack.c.h.b16 %v236
    %v822 = vunpack.c.l.b16 %v237
    %v823 = vunpack.c.h.b16 %v237
    %v824 = vunpack.c.l.b16 %v238
    %v825 = vunpack.c.h.b16 %v238
    %v826 = vunpack.c.l.b16 %v239
    %v827 = vunpack.c.h.b16 %v239
    %v828 = vunpack.c.l.b16 %v240
    %v829 = vunpack.c.h.b16 %v240
    %v830 = vunpack.c.l.b16 %v241
    %v831 = vunpack.c.h.b16 %v241
    %v832 = vunpack.c.l.b16 %v242
    %v833 = vunpack.c.h.b16 %v242
    %v834 = vunpack.c.l.b16 %v243
    %v835 = vunpack.c.h.b16 %v243
    %v836 = vunpack.c.l.b16 %v244
    %v837 = vunpack.c.h.b16 %v244
    %v838 = vunpack.c.l.b16 %v245
    %v839 = vunpack.c.h.b16 %v245
    %v840 = vunpack.c.l.b16 %v246
    %v841 = vunpack.c.h.b16 %v246
    %v842 = vunpack.c.l.b16 %v247
    %v843 = vunpack.c.h.b16 %v247
    %v844 = vunpack.c.l.b16 %v248
    %v845 = vunpack.c.h.b16 %v248
    %v846 = vunpack.c.l.b16 %v249
    %v847 = vunpack.c.h.b16 %v249
    %v848 = vunpack.c.l.b16 %v250
    %v849 = vunpack.c.h.b16 %v250
    %v850 = vunpack.c.l.b16 %v251
    %v851 = vunpack.c.h.b16 %v251
    %v852 = vunpack.c.l.b16 %v252
    %v853 = vunpack.c.h.b16 %v252
    %v854 = vunpack.c.l.b16 %v253
    %v855 = vunpack.c.h.b16 %v253
    %v856 = vunpack.c.l.b16 %v254
    %v857 = vunpack.c.h.b16 %v254
    %v858 = vunpack.c.l.b16 %v255
    %v859 = vunpack.c.h.b16 %v255
    %v860 = vunpack.c.l.b16 %v256
    %v861 = vunpack.c.h.b16 %v256
    %v862 = vunpack.c.l.b16 %v257
    %v863 = vunpack.c.h.b16 %v257
    %v864 = vunpack.c.l.b16 %v258
    %v865 = vunpack.c.h.b16 %v258
    %v866 = vunpack.c.l.b16 %v259
    %v867 = vunpack.c.h.b16 %v259
    %v868 = vunpack.c.l.b16 %v260
    %v869 = vunpack.c.h.b16 %v260
    %v870 = vunpack.c.l.b16 %v261
    %v871 = vunpack.c.h.b16 %v261
    %v872 = vpack.c.b16 %v484, %v480
    %v873 = vpack.c.b16 %v485, %v481
    %v874 = vpack.c.b16 %v486, %v482
    %v875 = vpack.c.b16 %v487, %v483
    %v876 = vpack.c.b16 %v492, %v488
    %v877 = vpack.c.b16 %v493, %v489
    %v878 = vpack.c.b16 %v494, %v490
    %v879 = vpack.c.b16 %v495, %v491
    %v880 = vpack.c.b16 %v500, %v496
    %v881 = vpack.c.b16 %v501, %v497
    %v882 = vpack.c.b16 %v502, %v498
    %v883 = vpack.c.b16 %v503, %v499
    %v884 = vpack.c.b16 %v508, %v504
    %v885 = vpack.c.b16 %v509, %v505
    %v886 = vpack.c.b16 %v510, %v506
    %v887 = vpack.c.b16 %v511, %v507
    %v888 = vpack.c.b16 %v516, %v512
    %v889 = vpack.c.b16 %v517, %v513
    %v890 = vpack.c.b16 %v518, %v514
    %v891 = vpack.c.b16 %v519, %v515
    %v892 = vpack.c.b16 %v524, %v520
    %v893 = vpack.c.b16 %v525, %v521
    %v894 = vpack.c.b16 %v526, %v522
    %v895 = vpack.c.b16 %v527, %v523
    %v896 = vpack.c.b16 %v532, %v528
    %v897 = vpack.c.b16 %v533, %v529
    %v898 = vpack.c.b16 %v534, %v530
    %v899 = vpack.c.b16 %v535, %v531
    %v900 = vpack.c.b16 %v540, %v536
    %v901 = vpack.c.b16 %v541, %v537
    %v902 = vpack.c.b16 %v542, %v538
    %v903 = vpack.c.b16 %v543, %v539
    %v904 = vpack.c.b16 %v548, %v544
    %v905 = vpack.c.b16 %v549, %v545
    %v906 = vpack.c.b16 %v550, %v546
    %v907 = vpack.c.b16 %v551, %v547
    %v908 = vpack.c.b16 %v556, %v552
    %v909 = vpack.c.b16 %v557, %v553
    %v910 = vpack.c.b16 %v558, %v554
    %v911 = vpack.c.b16 %v559, %v555
    %v912 = vpack.c.b16 %v564, %v560
    %v913 = vpack.c.b16 %v565, %v561
    %v914 = vpack.c.b16 %v566, %v562
    %v915 = vpack.c.b16 %v567, %v563
    %v916 = vpack.c.b16 %v572, %v568
    %v917 = vpack.c.b16 %v573, %v569
    %v918 = vpack.c.b16 %v574, %v570
    %v919 = vpack.c.b16 %v575, %v571
    %v920 = vpack.c.b16 %v580, %v576
    %v921 = vpack.c.b16 %v581, %v577
    %v922 = vpack.c.b16 %v582, %v578
    %v923 = vpack.c.b16 %v583, %v579
    %v924 = vpack.c.b16 %v588, %v584
    %v925 = vpack.c.b16 %v589, %v585
    %v926 = vpack.c.b16 %v590, %v586
    %v927 = vpack.c.b16 %v591, %v587
    %v928 = vpack.c.b16 %v596, %v592
    %v929 = vpack.c.b16 %v597, %v593
    %v930 = vpack.c.b16 %v598, %v594
    %v931 = vpack.c.b16 %v599, %v595
    %v932 = vpack.c.b16 %v604, %v600
    %v933 = vpack.c.b16 %v605, %v601
    %v934 = vpack.c.b16 %v606, %v602
    %v935 = vpack.c.b16 %v607, %v603
    %v936 = vpack.c.b16 %v612, %v608
    %v937 = vpack.c.b16 %v613, %v609
    %v938 = vpack.c.b16 %v614, %v610
    %v939 = vpack.c.b16 %v615, %v611
    %v940 = vpack.c.b16 %v620, %v616
    %v941 = vpack.c.b16 %v621, %v617
    %v942 = vpack.c.b16 %v622, %v618
    %v943 = vpack.c.b16 %v623, %v619
    %v944 = vpack.c.b16 %v628, %v624
    %v945 = vpack.c.b16 %v629, %v625
    %v946 = vpack.c.b16 %v630, %v626
    %v947 = vpack.c.b16 %v631, %v627
    %v948 = vpack.c.b16 %v636, %v632
    %v949 = vpack.c.b16 %v637, %v633
    %v950 = vpack.c.b16 %v638, %v634
    %v951 = vpack.c.b16 %v639, %v635
    %v952 = vpack.c.b16 %v644, %v640
    %v953 = vpack.c.b16 %v645, %v641
    %v954 = vpack.c.b16 %v646, %v642
    %v955 = vpack.c.b16 %v647, %v643
    %v956 = vpack.c.b16 %v652, %v648
    %v957 = vpack.c.b16 %v653, %v649
    %v958 = vpack.c.b16 %v654, %v650
    %v959 = vpack.c.b16 %v655, %v651
    %v960 = vpack.c.b16 %v660, %v656
    %v961 = vpack.c.b16 %v661, %v657
    %v962 = vpack.c.b16 %v662, %v658
    %v963 = vpack.c.b16 %v663, %v659
    %v964 = vpack.c.b16 %v668, %v664
    %v965 = vpack.c.b16 %v669, %v665
    %v966 = vpack.c.b16 %v670, %v666
    %v967 = vpack.c.b16 %v671, %v667
    %v968 = vpack.c.b16 %v676, %v672
    %v969 = vpack.c.b16 %v677, %v673
    %v970 = vpack.c.b16 %v678, %v674
    %v971 = vpack.c.b16 %v679, %v675
    %v972 = vpack.c.b16 %v684, %v680
    %v973 = vpack.c.b16 %v685, %v681
    %v974 = vpack.c.b16 %v686, %v682
    %v975 = vpack.c.b16 %v687, %v683
    %v976 = vpack.c.b16 %v692, %v688
    %v977 = vpack.c.b16 %v693, %v689
    %v978 = vpack.c.b16 %v694, %v690
    %v979 = vpack.c.b16 %v695, %v691
    %v980 = vpack.c.b16 %v700, %v696
    %v981 = vpack.c.b16 %v701, %v697
    %v982 = vpack.c.b16 %v702, %v698
    %v983 = vpack.c.b16 %v703, %v699
    %v984 = vpack.c.b16 %v708, %v704
    %v985 = vpack.c.b16 %v709, %v705
    %v986 = vpack.c.b16 %v710, %v706
    %v987 = vpack.c.b16 %v711, %v707
    %v988 = vpack.c.b16 %v716, %v712
    %v989 = vpack.c.b16 %v717, %v713
    %v990 = vpack.c.b16 %v718, %v714
    %v991 = vpack.c.b16 %v719, %v715
    %v992 = vpack.c.b16 %v724, %v720
    %v993 = vpack.c.b16 %v725, %v721
    %v994 = vpack.c.b16 %v726, %v722
    %v995 = vpack.c.b16 %v727, %v723
    %v996 = vpack.c.b16 %v732, %v728
    %v997 = vpack.c.b16 %v733, %v729
    %v998 = vpack.c.b16 %v734, %v730
    %v999 = vpack.c.b16 %v735, %v731
    %v1000 = vpack.c.b16 %v740, %v736
    %v1001 = vpack.c.b16 %v741, %v737
    %v1002 = vpack.c.b16 %v742, %v738
    %v1003 = vpack.c.b16 %v743, %v739
    %v1004 = vpack.c.b16 %v748, %v744
    %v1005 = vpack.c.b16 %v749, %v745
    %v1006 = vpack.c.b16 %v750, %v746
    %v1007 = vpack.c.b16 %v751, %v747
    %v1008 = vpack.c.b16 %v756, %v752
    %v1009 = vpack.c.b16 %v757, %v753
    %v1010 = vpack.c.b16 %v758, %v754
    %v1011 = vpack.c.b16 %v759, %v755
    %v1012 = vpack.c.b16 %v764, %v760
    %v1013 = vpack.c.b16 %v765, %v761
    %v1014 = vpack.c.b16 %v766, %v762
    %v1015 = vpack.c.b16 %v767, %v763
    %v1016 = vpack.c.b16 %v772, %v768
    %v1017 = vpack.c.b16 %v773, %v769
    %v1018 = vpack.c.b16 %v774, %v770
    %v1019 = vpack.c.b16 %v775, %v771
    %v1020 = vpack.c.b16 %v780, %v776
    %v1021 = vpack.c.b16 %v781, %v777
    %v1022 = vpack.c.b16 %v782, %v778
    %v1023 = vpack.c.b16 %v783, %v779
    %v1024 = vpack.c.b16 %v788, %v784
    %v1025 = vpack.c.b16 %v789, %v785
    %v1026 = vpack.c.b16 %v790, %v786
    %v1027 = vpack.c.b16 %v791, %v787
    %v1028 = vpack.c.b16 %v796, %v792
    %v1029 = vpack.c.b16 %v797, %v793
    %v1030 = vpack.c.b16 %v798, %v794
    %v1031 = vpack.c.b16 %v799, %v795
    %v1032 = vpack.c.b16 %v804, %v800
    %v1033 = vpack.c.b16 %v805, %v801
    %v1034 = vpack.c.b16 %v806, %v802
    %v1035 = vpack.c.b16 %v807, %v803
    %v1036 = vpack.c.b16 %v812, %v808
    %v1037 = vpack.c.b16 %v813, %v809
    %v1038 = vpack.c.b16 %v814, %v810
    %v1039 = vpack.c.b16 %v815, %v811
    %v1040 = vpack.c.b16 %v820, %v816
    %v1041 = vpack.c.b16 %v821, %v817
    %v1042 = vpack.c.b16 %v822, %v818
    %v1043 = vpack.c.b16 %v823, %v819
    %v1044 = vpack.c.b16 %v828, %v824
    %v1045 = vpack.c.b16 %v829, %v825
    %v1046 = vpack.c.b16 %v830, %v826
    %v1047 = vpack.c.b16 %v831, %v827
    %v1048 = vpack.c.b16 %v836, %v832
    %v1049 = vpack.c.b16 %v837, %v833
    %v1050 = vpack.c.b16 %v838, %v834
    %v1051 = vpack.c.b16 %v839, %v835
    %v1052 = vpack.c.b16 %v844, %v840
    %v1053 = vpack.c.b16 %v845, %v841
    %v1054 = vpack.c.b16 %v846, %v842
    %v1055 = vpack.c.b16 %v847, %v843
    %v1056 = vpack.c.b16 %v852, %v848
    %v1057 = vpack.c.b16 %v853, %v849
    %v1058 = vpack.c.b16 %v854, %v850
    %v1059 = vpack.c.b16 %v855, %v851
    %v1060 = vpack.c.b16 %v860, %v856
    %v1061 = vpack.c.b16 %v861, %v857
    %v1062 = vpack.c.b16 %v862, %v858
    %v1063 = vpack.c.b16 %v863, %v859
    %v1064 = vpack.c.b16 %v868, %v864
    %v1065 = vpack.c.b16 %v869, %v865
    %v1066 = vpack.c.b16 %v870, %v866
    %v1067 = vpack.c.b16 %v871, %v867
    %vm1264 = vcmask 130048
    %v1266 = vsel %vm1264, %v65, 0
    %1268 = vmatprep.subr.bf16.mxu0 %v901
    %1269 = vmatpush1.bf16.msra.mxu0 %v900
    %1270 = vmatprep.subr.bf16.mxu0 %v897
    %1271 = vmatpush1.bf16.msra.mxu0 %v896
    %1272 = vmatprep.subr.bf16.mxu0 %v893
    %1273 = vmatpush1.bf16.msra.mxu0 %v892
    %1274 = vmatprep.subr.bf16.mxu0 %v889
    %1275 = vmatpush1.bf16.msra.mxu0 %v888
    %1276 = vmatprep.subr.bf16.mxu0 %v885
    %1277 = vmatpush1.bf16.msra.mxu0 %v884
    %1278 = vmatprep.subr.bf16.mxu0 %v881
    %1279 = vmatpush1.bf16.msra.mxu0 %v880
    %1280 = vmatprep.subr.bf16.mxu0 %v877
    %1281 = vmatpush1.bf16.msra.mxu0 %v876
    %1282 = vmatprep.subr.bf16.mxu0 %v873
    %1283 = vmatpush1.bf16.msra.mxu0 %v872
    %1284 = vmatprep.subr.bf16.mxu0 %v933
    %1285 = vmatpush2.bf16.msra.mxu0 %v932
    %1286 = vmatprep.subr.bf16.mxu0 %v929
    %1287 = vmatpush2.bf16.msra.mxu0 %v928
    %1288 = vmatprep.subr.bf16.mxu0 %v925
    %1289 = vmatpush2.bf16.msra.mxu0 %v924
    %1290 = vmatprep.subr.bf16.mxu0 %v921
    %1291 = vmatpush2.bf16.msra.mxu0 %v920
    %1292 = vmatprep.subr.bf16.mxu0 %v917
    %1293 = vmatpush2.bf16.msra.mxu0 %v916
    %1294 = vmatprep.subr.bf16.mxu0 %v913
    %1295 = vmatpush2.bf16.msra.mxu0 %v912
    %1296 = vmatprep.subr.bf16.mxu0 %v909
    %1297 = vmatpush2.bf16.msra.mxu0 %v908
    %1298 = vmatprep.subr.bf16.mxu0 %v905
    %1299 = vmatpush2.bf16.msra.mxu0 %v904
    %1300 = vmatprep.mubr.bf16.mxu0 %v60
    %1301 = vmatmul.mubr.bf16.gmra.mxu0 %v59
    %v1302 = vpop.f32.mrf.mxu0
    %v1303 = vadd.f32 %v267, %v1302
    %v1304 = vpop.f32.mrf.mxu0
    %v1305 = vadd.f32 %v271, %v1304
    %v1306 = vpop.f32.mrf.mxu0
    %v1307 = vpop.f32.mrf.mxu0
    %1308 = vdwg.mxu0
    %1309 = vmatprep.subr.bf16.mxu0 %v965
    %1310 = vmatpush1.bf16.msra.mxu0 %v964
    %1311 = vmatprep.subr.bf16.mxu0 %v961
    %1312 = vmatpush1.bf16.msra.mxu0 %v960
    %1313 = vmatprep.subr.bf16.mxu0 %v957
    %1314 = vmatpush1.bf16.msra.mxu0 %v956
    %1315 = vmatprep.subr.bf16.mxu0 %v953
    %1316 = vmatpush1.bf16.msra.mxu0 %v952
    %1317 = vmatprep.subr.bf16.mxu0 %v949
    %1318 = vmatpush1.bf16.msra.mxu0 %v948
    %1319 = vmatprep.subr.bf16.mxu0 %v945
    %1320 = vmatpush1.bf16.msra.mxu0 %v944
    %1321 = vmatprep.subr.bf16.mxu0 %v941
    %1322 = vmatpush1.bf16.msra.mxu0 %v940
    %1323 = vmatprep.subr.bf16.mxu0 %v937
    %1324 = vmatpush1.bf16.msra.mxu0 %v936
    %1325 = vmatprep.subr.bf16.mxu0 %v997
    %1326 = vmatpush2.bf16.msra.mxu0 %v996
    %1327 = vmatprep.subr.bf16.mxu0 %v993
    %1328 = vmatpush2.bf16.msra.mxu0 %v992
    %1329 = vmatprep.subr.bf16.mxu0 %v989
    %1330 = vmatpush2.bf16.msra.mxu0 %v988
    %1331 = vmatprep.subr.bf16.mxu0 %v985
    %1332 = vmatpush2.bf16.msra.mxu0 %v984
    %1333 = vmatprep.subr.bf16.mxu0 %v981
    %1334 = vmatpush2.bf16.msra.mxu0 %v980
    %1335 = vmatprep.subr.bf16.mxu0 %v977
    %1336 = vmatpush2.bf16.msra.mxu0 %v976
    %1337 = vmatprep.subr.bf16.mxu0 %v973
    %1338 = vmatpush2.bf16.msra.mxu0 %v972
    %1339 = vmatprep.subr.bf16.mxu0 %v969
    %1340 = vmatpush2.bf16.msra.mxu0 %v968
    %1341 = vmatprep.mubr.bf16.mxu0 %v62
    %1342 = vmatmul.mubr.bf16.gmra.mxu0 %v61
    %v1343 = vpop.f32.mrf.mxu0
    %v1344 = vadd.f32 %v1303, %v1343
    %v1345 = vpop.f32.mrf.mxu0
    %v1346 = vadd.f32 %v1305, %v1345
    %v1347 = vpop.f32.mrf.mxu0
    %v1348 = vpop.f32.mrf.mxu0
    %1349 = vdwg.mxu0
    %1350 = vmatprep.subr.bf16.mxu0 %v1029
    %1351 = vmatpush1.bf16.msra.mxu0 %v1028
    %1352 = vmatprep.subr.bf16.mxu0 %v1025
    %1353 = vmatpush1.bf16.msra.mxu0 %v1024
    %1354 = vmatprep.subr.bf16.mxu0 %v1021
    %1355 = vmatpush1.bf16.msra.mxu0 %v1020
    %1356 = vmatprep.subr.bf16.mxu0 %v1017
    %1357 = vmatpush1.bf16.msra.mxu0 %v1016
    %1358 = vmatprep.subr.bf16.mxu0 %v1013
    %1359 = vmatpush1.bf16.msra.mxu0 %v1012
    %1360 = vmatprep.subr.bf16.mxu0 %v1009
    %1361 = vmatpush1.bf16.msra.mxu0 %v1008
    %1362 = vmatprep.subr.bf16.mxu0 %v1005
    %1363 = vmatpush1.bf16.msra.mxu0 %v1004
    %1364 = vmatprep.subr.bf16.mxu0 %v1001
    %1365 = vmatpush1.bf16.msra.mxu0 %v1000
    %1366 = vmatprep.subr.bf16.mxu0 %v1061
    %1367 = vmatpush2.bf16.msra.mxu0 %v1060
    %1368 = vmatprep.subr.bf16.mxu0 %v1057
    %1369 = vmatpush2.bf16.msra.mxu0 %v1056
    %1370 = vmatprep.subr.bf16.mxu0 %v1053
    %1371 = vmatpush2.bf16.msra.mxu0 %v1052
    %1372 = vmatprep.subr.bf16.mxu0 %v1049
    %1373 = vmatpush2.bf16.msra.mxu0 %v1048
    %1374 = vmatprep.subr.bf16.mxu0 %v1045
    %1375 = vmatpush2.bf16.msra.mxu0 %v1044
    %1376 = vmatprep.subr.bf16.mxu0 %v1041
    %1377 = vmatpush2.bf16.msra.mxu0 %v1040
    %1378 = vmatprep.subr.bf16.mxu0 %v1037
    %1379 = vmatpush2.bf16.msra.mxu0 %v1036
    %1380 = vmatprep.subr.bf16.mxu0 %v1033
    %1381 = vmatpush2.bf16.msra.mxu0 %v1032
    %1382 = vmatprep.mubr.bf16.mxu0 %v64
    %1383 = vmatmul.mubr.bf16.gmra.mxu0 %v63
    %v1384 = vpop.f32.mrf.mxu0
    %v1385 = vadd.f32 %v1344, %v1384
    %v1386 = vpop.f32.mrf.mxu0
    %v1387 = vadd.f32 %v1346, %v1386
    %v1388 = vpop.f32.mrf.mxu0
    %v1389 = vpop.f32.mrf.mxu0
    %1390 = vdwg.mxu0
    %1391 = vmatprep.subr.bf16.mxu0 0
    %1392 = vmatpush1.bf16.msra.mxu0 0
    %1393 = vmatprep.subr.bf16.mxu0 0
    %1394 = vmatpush1.bf16.msra.mxu0 0
    %1395 = vmatprep.subr.bf16.mxu0 0
    %1396 = vmatpush1.bf16.msra.mxu0 0
    %1397 = vmatprep.subr.bf16.mxu0 0
    %1398 = vmatpush1.bf16.msra.mxu0 0
    %1399 = vmatprep.subr.bf16.mxu0 0
    %1400 = vmatpush1.bf16.msra.mxu0 0
    %1401 = vmatprep.subr.bf16.mxu0 0
    %1402 = vmatpush1.bf16.msra.mxu0 0
    %1403 = vmatprep.subr.bf16.mxu0 0
    %1404 = vmatpush1.bf16.msra.mxu0 0
    %1405 = vmatprep.subr.bf16.mxu0 %v1065
    %1406 = vmatpush1.bf16.msra.mxu0 %v1064
    %1407 = vmatprep.subr.bf16.mxu0 0
    %1408 = vmatpush2.bf16.msra.mxu0 0
    %1409 = vmatprep.subr.bf16.mxu0 0
    %1410 = vmatpush2.bf16.msra.mxu0 0
    %1411 = vmatprep.subr.bf16.mxu0 0
    %1412 = vmatpush2.bf16.msra.mxu0 0
    %1413 = vmatprep.subr.bf16.mxu0 0
    %1414 = vmatpush2.bf16.msra.mxu0 0
    %1415 = vmatprep.subr.bf16.mxu0 0
    %1416 = vmatpush2.bf16.msra.mxu0 0
    %1417 = vmatprep.subr.bf16.mxu0 0
    %1418 = vmatpush2.bf16.msra.mxu0 0
    %1419 = vmatprep.subr.bf16.mxu0 0
    %1420 = vmatpush2.bf16.msra.mxu0 0
    %1421 = vmatprep.subr.bf16.mxu0 0
    %1422 = vmatpush2.bf16.msra.mxu0 0
    %1423 = vmatprep.mubr.bf16.mxu0 0
    %1424 = vmatmul.mubr.bf16.gmra.mxu0 %v1266
    %v1425 = vpop.f32.mrf.mxu0
    %v1426 = vadd.f32 %v1385, %v1425
    %v1427 = vpop.f32.mrf.mxu0
    %v1428 = vadd.f32 %v1387, %v1427
    %v1429 = vpop.f32.mrf.mxu0
    %v1430 = vpop.f32.mrf.mxu0
    %1431 = vdwg.mxu0
    %1432 = vmatprep.subr.bf16.mxu0 %v903
    %1433 = vmatpush1.bf16.msra.mxu0 %v902
    %1434 = vmatprep.subr.bf16.mxu0 %v899
    %1435 = vmatpush1.bf16.msra.mxu0 %v898
    %1436 = vmatprep.subr.bf16.mxu0 %v895
    %1437 = vmatpush1.bf16.msra.mxu0 %v894
    %1438 = vmatprep.subr.bf16.mxu0 %v891
    %1439 = vmatpush1.bf16.msra.mxu0 %v890
    %1440 = vmatprep.subr.bf16.mxu0 %v887
    %1441 = vmatpush1.bf16.msra.mxu0 %v886
    %1442 = vmatprep.subr.bf16.mxu0 %v883
    %1443 = vmatpush1.bf16.msra.mxu0 %v882
    %1444 = vmatprep.subr.bf16.mxu0 %v879
    %1445 = vmatpush1.bf16.msra.mxu0 %v878
    %1446 = vmatprep.subr.bf16.mxu0 %v875
    %1447 = vmatpush1.bf16.msra.mxu0 %v874
    %1448 = vmatprep.subr.bf16.mxu0 %v935
    %1449 = vmatpush2.bf16.msra.mxu0 %v934
    %1450 = vmatprep.subr.bf16.mxu0 %v931
    %1451 = vmatpush2.bf16.msra.mxu0 %v930
    %1452 = vmatprep.subr.bf16.mxu0 %v927
    %1453 = vmatpush2.bf16.msra.mxu0 %v926
    %1454 = vmatprep.subr.bf16.mxu0 %v923
    %1455 = vmatpush2.bf16.msra.mxu0 %v922
    %1456 = vmatprep.subr.bf16.mxu0 %v919
    %1457 = vmatpush2.bf16.msra.mxu0 %v918
    %1458 = vmatprep.subr.bf16.mxu0 %v915
    %1459 = vmatpush2.bf16.msra.mxu0 %v914
    %1460 = vmatprep.subr.bf16.mxu0 %v911
    %1461 = vmatpush2.bf16.msra.mxu0 %v910
    %1462 = vmatprep.subr.bf16.mxu0 %v907
    %1463 = vmatpush2.bf16.msra.mxu0 %v906
    %1464 = vmatprep.mubr.bf16.mxu0 %v60
    %1465 = vmatmul.mubr.bf16.gmra.mxu0 %v59
    %v1466 = vpop.f32.mrf.mxu0
    %v1467 = vadd.f32 %v275, %v1466
    %v1468 = vpop.f32.mrf.mxu0
    %v1469 = vadd.f32 %v279, %v1468
    %v1470 = vpop.f32.mrf.mxu0
    %v1471 = vpop.f32.mrf.mxu0
    %1472 = vdwg.mxu0
    %1473 = vmatprep.subr.bf16.mxu0 %v967
    %1474 = vmatpush1.bf16.msra.mxu0 %v966
    %1475 = vmatprep.subr.bf16.mxu0 %v963
    %1476 = vmatpush1.bf16.msra.mxu0 %v962
    %1477 = vmatprep.subr.bf16.mxu0 %v959
    %1478 = vmatpush1.bf16.msra.mxu0 %v958
    %1479 = vmatprep.subr.bf16.mxu0 %v955
    %1480 = vmatpush1.bf16.msra.mxu0 %v954
    %1481 = vmatprep.subr.bf16.mxu0 %v951
    %1482 = vmatpush1.bf16.msra.mxu0 %v950
    %1483 = vmatprep.subr.bf16.mxu0 %v947
    %1484 = vmatpush1.bf16.msra.mxu0 %v946
    %1485 = vmatprep.subr.bf16.mxu0 %v943
    %1486 = vmatpush1.bf16.msra.mxu0 %v942
    %1487 = vmatprep.subr.bf16.mxu0 %v939
    %1488 = vmatpush1.bf16.msra.mxu0 %v938
    %1489 = vmatprep.subr.bf16.mxu0 %v999
    %1490 = vmatpush2.bf16.msra.mxu0 %v998
    %1491 = vmatprep.subr.bf16.mxu0 %v995
    %1492 = vmatpush2.bf16.msra.mxu0 %v994
    %1493 = vmatprep.subr.bf16.mxu0 %v991
    %1494 = vmatpush2.bf16.msra.mxu0 %v990
    %1495 = vmatprep.subr.bf16.mxu0 %v987
    %1496 = vmatpush2.bf16.msra.mxu0 %v986
    %1497 = vmatprep.subr.bf16.mxu0 %v983
    %1498 = vmatpush2.bf16.msra.mxu0 %v982
    %1499 = vmatprep.subr.bf16.mxu0 %v979
    %1500 = vmatpush2.bf16.msra.mxu0 %v978
    %1501 = vmatprep.subr.bf16.mxu0 %v975
    %1502 = vmatpush2.bf16.msra.mxu0 %v974
    %1503 = vmatprep.subr.bf16.mxu0 %v971
    %1504 = vmatpush2.bf16.msra.mxu0 %v970
    %1505 = vmatprep.mubr.bf16.mxu0 %v62
    %1506 = vmatmul.mubr.bf16.gmra.mxu0 %v61
    %v1507 = vpop.f32.mrf.mxu0
    %v1508 = vadd.f32 %v1467, %v1507
    %v1509 = vpop.f32.mrf.mxu0
    %v1510 = vadd.f32 %v1469, %v1509
    %v1511 = vpop.f32.mrf.mxu0
    %v1512 = vpop.f32.mrf.mxu0
    %1513 = vdwg.mxu0
    %1514 = vmatprep.subr.bf16.mxu0 %v1031
    %1515 = vmatpush1.bf16.msra.mxu0 %v1030
    %1516 = vmatprep.subr.bf16.mxu0 %v1027
    %1517 = vmatpush1.bf16.msra.mxu0 %v1026
    %1518 = vmatprep.subr.bf16.mxu0 %v1023
    %1519 = vmatpush1.bf16.msra.mxu0 %v1022
    %1520 = vmatprep.subr.bf16.mxu0 %v1019
    %1521 = vmatpush1.bf16.msra.mxu0 %v1018
    %1522 = vmatprep.subr.bf16.mxu0 %v1015
    %1523 = vmatpush1.bf16.msra.mxu0 %v1014
    %1524 = vmatprep.subr.bf16.mxu0 %v1011
    %1525 = vmatpush1.bf16.msra.mxu0 %v1010
    %1526 = vmatprep.subr.bf16.mxu0 %v1007
    %1527 = vmatpush1.bf16.msra.mxu0 %v1006
    %1528 = vmatprep.subr.bf16.mxu0 %v1003
    %1529 = vmatpush1.bf16.msra.mxu0 %v1002
    %1530 = vmatprep.subr.bf16.mxu0 %v1063
    %1531 = vmatpush2.bf16.msra.mxu0 %v1062
    %1532 = vmatprep.subr.bf16.mxu0 %v1059
    %1533 = vmatpush2.bf16.msra.mxu0 %v1058
    %1534 = vmatprep.subr.bf16.mxu0 %v1055
    %1535 = vmatpush2.bf16.msra.mxu0 %v1054
    %1536 = vmatprep.subr.bf16.mxu0 %v1051
    %1537 = vmatpush2.bf16.msra.mxu0 %v1050
    %1538 = vmatprep.subr.bf16.mxu0 %v1047
    %1539 = vmatpush2.bf16.msra.mxu0 %v1046
    %1540 = vmatprep.subr.bf16.mxu0 %v1043
    %1541 = vmatpush2.bf16.msra.mxu0 %v1042
    %1542 = vmatprep.subr.bf16.mxu0 %v1039
    %1543 = vmatpush2.bf16.msra.mxu0 %v1038
    %1544 = vmatprep.subr.bf16.mxu0 %v1035
    %1545 = vmatpush2.bf16.msra.mxu0 %v1034
    %1546 = vmatprep.mubr.bf16.mxu0 %v64
    %1547 = vmatmul.mubr.bf16.gmra.mxu0 %v63
    %v1548 = vpop.f32.mrf.mxu0
    %v1549 = vadd.f32 %v1508, %v1548
    %v1550 = vpop.f32.mrf.mxu0
    %v1551 = vadd.f32 %v1510, %v1550
    %v1552 = vpop.f32.mrf.mxu0
    %v1553 = vpop.f32.mrf.mxu0
    %1554 = vdwg.mxu0
    %1555 = vmatprep.subr.bf16.mxu0 0
    %1556 = vmatpush1.bf16.msra.mxu0 0
    %1557 = vmatprep.subr.bf16.mxu0 0
    %1558 = vmatpush1.bf16.msra.mxu0 0
    %1559 = vmatprep.subr.bf16.mxu0 0
    %1560 = vmatpush1.bf16.msra.mxu0 0
    %1561 = vmatprep.subr.bf16.mxu0 0
    %1562 = vmatpush1.bf16.msra.mxu0 0
    %1563 = vmatprep.subr.bf16.mxu0 0
    %1564 = vmatpush1.bf16.msra.mxu0 0
    %1565 = vmatprep.subr.bf16.mxu0 0
    %1566 = vmatpush1.bf16.msra.mxu0 0
    %1567 = vmatprep.subr.bf16.mxu0 0
    %1568 = vmatpush1.bf16.msra.mxu0 0
    %1569 = vmatprep.subr.bf16.mxu0 %v1067
    %1570 = vmatpush1.bf16.msra.mxu0 %v1066
    %1571 = vmatprep.subr.bf16.mxu0 0
    %1572 = vmatpush2.bf16.msra.mxu0 0
    %1573 = vmatprep.subr.bf16.mxu0 0
    %1574 = vmatpush2.bf16.msra.mxu0 0
    %1575 = vmatprep.subr.bf16.mxu0 0
    %1576 = vmatpush2.bf16.msra.mxu0 0
    %1577 = vmatprep.subr.bf16.mxu0 0
    %1578 = vmatpush2.bf16.msra.mxu0 0
    %1579 = vmatprep.subr.bf16.mxu0 0
    %1580 = vmatpush2.bf16.msra.mxu0 0
    %1581 = vmatprep.subr.bf16.mxu0 0
    %1582 = vmatpush2.bf16.msra.mxu0 0
    %1583 = vmatprep.subr.bf16.mxu0 0
    %1584 = vmatpush2.bf16.msra.mxu0 0
    %1585 = vmatprep.subr.bf16.mxu0 0
    %1586 = vmatpush2.bf16.msra.mxu0 0
    %1587 = vmatprep.mubr.bf16.mxu0 0
    %1588 = vmatmul.mubr.bf16.gmra.mxu0 %v1266
    %v1589 = vpop.f32.mrf.mxu0
    %v1590 = vadd.f32 %v1549, %v1589
    %v1591 = vpop.f32.mrf.mxu0
    %v1592 = vadd.f32 %v1551, %v1591
    %v1593 = vpop.f32.mrf.mxu0
    %v1594 = vpop.f32.mrf.mxu0
    %1595 = vdwg.mxu0
    %v1596 = vmax.f32 %v1426, 0.0
    %v1597 = vmax.f32 %v1428, 0.0
    %v1598 = vmax.f32 %v1590, 0.0
    %v1599 = vmax.f32 %v1592, 0.0
    %v1600 = vpack.c.bf16 %v1596, %v1596
    %v1601 = vpack.c.bf16 %v1597, %v1597
    %v1602 = vpack.c.bf16 %v1598, %v1598
    %v1603 = vpack.c.bf16 %v1599, %v1599
    %v1604 = vld [vmem:[#allocation4] sm:$0xff]
    %v1605 = vld [vmem:[#allocation4 + $0x8] sm:$0xff]
    %v1606 = vld [vmem:[#allocation4 + $0x10] sm:$0xff]
    %v1607 = vld [vmem:[#allocation4 + $0x18] sm:$0xff]
    %v1608 = vld [vmem:[#allocation4 + $0x20] sm:$0xff]
    %v1609 = vld [vmem:[#allocation4 + $0x28] sm:$0xff]
    %v1610 = vld [vmem:[#allocation4 + $0x30] sm:$0xff]
    %v1611 = vld [vmem:[#allocation4 + $0x38] sm:$0xff]
    %v1612 = vld [vmem:[#allocation4 + $0x40] sm:$0xff]
    %v1613 = vld [vmem:[#allocation4 + $0x48] sm:$0xff]
    %v1614 = vld [vmem:[#allocation4 + $0x50] sm:$0xff]
    %v1615 = vld [vmem:[#allocation4 + $0x58] sm:$0xff]
    %v1616 = vld [vmem:[#allocation4 + $0x60] sm:$0xff]
    %v1617 = vld [vmem:[#allocation4 + $0x68] sm:$0xff]
    %v1618 = vld [vmem:[#allocation4 + $0x70] sm:$0xff]
    %v1619 = vld [vmem:[#allocation4 + $0x78] sm:$0xff]
    %v1620 = vld [vmem:[#allocation4 + $0x80] sm:$0xff]
    %v1621 = vld [vmem:[#allocation4 + $0x88] sm:$0xff]
    %v1622 = vld [vmem:[#allocation4 + $0x90] sm:$0xff]
    %v1623 = vld [vmem:[#allocation4 + $0x98] sm:$0xff]
    %v1624 = vld [vmem:[#allocation4 + $0xa0] sm:$0xff]
    %v1625 = vld [vmem:[#allocation4 + $0xa8] sm:$0xff]
    %v1626 = vld [vmem:[#allocation4 + $0xb0] sm:$0xff]
    %v1627 = vld [vmem:[#allocation4 + $0xb8] sm:$0xff]
    %v1628 = vld [vmem:[#allocation4 + $0xc0] sm:$0xff]
    %v1629 = vld [vmem:[#allocation4 + $0xc8] sm:$0xff]
    %v1630 = vld [vmem:[#allocation4 + $0xd0] sm:$0xff]
    %v1631 = vld [vmem:[#allocation4 + $0xd8] sm:$0xff]
    %v1632 = vld [vmem:[#allocation4 + $0xe0] sm:$0xff]
    %v1633 = vld [vmem:[#allocation4 + $0xe8] sm:$0xff]
    %v1634 = vld [vmem:[#allocation4 + $0xf0] sm:$0xff]
    %v1635 = vld [vmem:[#allocation4 + $0xf8] sm:$0xff]
    %v1636 = vld [vmem:[#allocation4 + $0x100] sm:$0xff]
    %v1637 = vld [vmem:[#allocation4 + $0x108] sm:$0xff]
    %v1638 = vld [vmem:[#allocation4 + $0x110] sm:$0xff]
    %v1639 = vld [vmem:[#allocation4 + $0x118] sm:$0xff]
    %v1640 = vld [vmem:[#allocation4 + $0x120] sm:$0xff]
    %v1641 = vld [vmem:[#allocation4 + $0x128] sm:$0xff]
    %v1642 = vld [vmem:[#allocation4 + $0x130] sm:$0xff]
    %v1643 = vld [vmem:[#allocation4 + $0x138] sm:$0xff]
    %v1644 = vld [vmem:[#allocation4 + $0x140] sm:$0xff]
    %v1645 = vld [vmem:[#allocation4 + $0x148] sm:$0xff]
    %v1646 = vld [vmem:[#allocation4 + $0x150] sm:$0xff]
    %v1647 = vld [vmem:[#allocation4 + $0x158] sm:$0xff]
    %v1648 = vld [vmem:[#allocation4 + $0x160] sm:$0xff]
    %v1649 = vld [vmem:[#allocation4 + $0x168] sm:$0xff]
    %v1650 = vld [vmem:[#allocation4 + $0x170] sm:$0xff]
    %v1651 = vld [vmem:[#allocation4 + $0x178] sm:$0xff]
    %v1652 = vld [vmem:[#allocation4 + $0x180] sm:$0xff]
    %v1653 = vld [vmem:[#allocation4 + $0x188] sm:$0xff]
    %v1654 = vld [vmem:[#allocation4 + $0x190] sm:$0xff]
    %v1655 = vld [vmem:[#allocation4 + $0x198] sm:$0xff]
    %v1656 = vld [vmem:[#allocation4 + $0x1a0] sm:$0xff]
    %v1657 = vld [vmem:[#allocation4 + $0x1a8] sm:$0xff]
    %v1658 = vld [vmem:[#allocation4 + $0x1b0] sm:$0xff]
    %v1659 = vld [vmem:[#allocation4 + $0x1b8] sm:$0xff]
    %v1660 = vld [vmem:[#allocation4 + $0x1c0] sm:$0xff]
    %v1661 = vld [vmem:[#allocation4 + $0x1c8] sm:$0xff]
    %v1662 = vld [vmem:[#allocation4 + $0x1d0] sm:$0xff]
    %v1663 = vld [vmem:[#allocation4 + $0x1d8] sm:$0xff]
    %v1664 = vld [vmem:[#allocation4 + $0x1e0] sm:$0xff]
    %v1665 = vld [vmem:[#allocation4 + $0x1e8] sm:$0xff]
    %v1666 = vld [vmem:[#allocation4 + $0x1f0] sm:$0xff]
    %v1667 = vld [vmem:[#allocation4 + $0x1f8] sm:$0xff]
    %v1668 = vld [vmem:[#allocation4 + $0x200] sm:$0xff]
    %v1669 = vld [vmem:[#allocation4 + $0x208] sm:$0xff]
    %v1670 = vld [vmem:[#allocation4 + $0x210] sm:$0xff]
    %v1671 = vld [vmem:[#allocation4 + $0x218] sm:$0xff]
    %v1672 = vld [vmem:[#allocation4 + $0x220] sm:$0xff]
    %v1673 = vld [vmem:[#allocation4 + $0x228] sm:$0xff]
    %v1674 = vld [vmem:[#allocation4 + $0x230] sm:$0xff]
    %v1675 = vld [vmem:[#allocation4 + $0x238] sm:$0xff]
    %v1676 = vld [vmem:[#allocation4 + $0x240] sm:$0xff]
    %v1677 = vld [vmem:[#allocation4 + $0x248] sm:$0xff]
    %v1678 = vld [vmem:[#allocation4 + $0x250] sm:$0xff]
    %v1679 = vld [vmem:[#allocation4 + $0x258] sm:$0xff]
    %v1680 = vld [vmem:[#allocation4 + $0x260] sm:$0xff]
    %v1681 = vld [vmem:[#allocation4 + $0x268] sm:$0xff]
    %v1682 = vld [vmem:[#allocation4 + $0x270] sm:$0xff]
    %v1683 = vld [vmem:[#allocation4 + $0x278] sm:$0xff]
    %v1684 = vld [vmem:[#allocation4 + $0x280] sm:$0xff]
    %v1685 = vld [vmem:[#allocation4 + $0x288] sm:$0xff]
    %v1686 = vld [vmem:[#allocation4 + $0x290] sm:$0xff]
    %v1687 = vld [vmem:[#allocation4 + $0x298] sm:$0xff]
    %v1688 = vld [vmem:[#allocation4 + $0x2a0] sm:$0xff]
    %v1689 = vld [vmem:[#allocation4 + $0x2a8] sm:$0xff]
    %v1690 = vld [vmem:[#allocation4 + $0x2b0] sm:$0xff]
    %v1691 = vld [vmem:[#allocation4 + $0x2b8] sm:$0xff]
    %v1692 = vld [vmem:[#allocation4 + $0x2c0] sm:$0xff]
    %v1693 = vld [vmem:[#allocation4 + $0x2c8] sm:$0xff]
    %v1694 = vld [vmem:[#allocation4 + $0x2d0] sm:$0xff]
    %v1695 = vld [vmem:[#allocation4 + $0x2d8] sm:$0xff]
    %v1696 = vld [vmem:[#allocation4 + $0x2e0] sm:$0xff]
    %v1697 = vld [vmem:[#allocation4 + $0x2e8] sm:$0xff]
    %v1698 = vld [vmem:[#allocation4 + $0x2f0] sm:$0xff]
    %v1699 = vld [vmem:[#allocation4 + $0x2f8] sm:$0xff]
    %v1700 = vld [vmem:[#allocation4 + $0x300] sm:$0xff]
    %v1701 = vld [vmem:[#allocation4 + $0x308] sm:$0xff]
    %v1702 = vld [vmem:[#allocation4 + $0x310] sm:$0xff]
    %v1703 = vld [vmem:[#allocation4 + $0x318] sm:$0xff]
    %v1704 = vld [vmem:[#allocation4 + $0x320] sm:$0xff]
    %v1705 = vld [vmem:[#allocation4 + $0x328] sm:$0xff]
    %v1706 = vld [vmem:[#allocation4 + $0x330] sm:$0xff]
    %v1707 = vld [vmem:[#allocation4 + $0x338] sm:$0xff]
    %v1708 = vld [vmem:[#allocation4 + $0x340] sm:$0xff]
    %v1709 = vld [vmem:[#allocation4 + $0x348] sm:$0xff]
    %v1710 = vld [vmem:[#allocation4 + $0x350] sm:$0xff]
    %v1711 = vld [vmem:[#allocation4 + $0x358] sm:$0xff]
    %v1712 = vld [vmem:[#allocation4 + $0x360] sm:$0xff]
    %v1713 = vld [vmem:[#allocation4 + $0x368] sm:$0xff]
    %v1714 = vld [vmem:[#allocation4 + $0x370] sm:$0xff]
    %v1715 = vld [vmem:[#allocation4 + $0x378] sm:$0xff]
    %v1716 = vld [vmem:[#allocation4 + $0x380] sm:$0xff]
    %v1717 = vld [vmem:[#allocation4 + $0x388] sm:$0xff]
    %v1718 = vld [vmem:[#allocation4 + $0x390] sm:$0xff]
    %v1719 = vld [vmem:[#allocation4 + $0x398] sm:$0xff]
    %v1720 = vld [vmem:[#allocation4 + $0x3a0] sm:$0xff]
    %v1721 = vld [vmem:[#allocation4 + $0x3a8] sm:$0xff]
    %v1722 = vld [vmem:[#allocation4 + $0x3b0] sm:$0xff]
    %v1723 = vld [vmem:[#allocation4 + $0x3b8] sm:$0xff]
    %v1724 = vld [vmem:[#allocation4 + $0x3c0] sm:$0xff]
    %v1725 = vld [vmem:[#allocation4 + $0x3c8] sm:$0xff]
    %v1726 = vld [vmem:[#allocation4 + $0x3d0] sm:$0xff]
    %v1727 = vld [vmem:[#allocation4 + $0x3d8] sm:$0xff]
    %v1728 = vld [vmem:[#allocation4 + $0x3e0] sm:$0xff]
    %v1729 = vld [vmem:[#allocation4 + $0x3e8] sm:$0xff]
    %v1730 = vld [vmem:[#allocation4 + $0x3f0] sm:$0xff]
    %v1731 = vld [vmem:[#allocation4 + $0x3f8] sm:$0xff]
    %v1732 = vld [vmem:[%s4] sm:$0xf]
    %v1734 = vlaneseq
    %v1735 = vshrl.u32 %v1734, 7
    %v1736 = vsub.s32 0, %v1735
    %v1737 = vrot.slane %v1732, %v1736
    %v1738 = vlaneseq
    %v1739 = vshrl.u32 %v1738, 7
    %v1740 = vsub.s32 1, %v1739
    %v1741 = vrot.slane %v1732, %v1740
    %v1742 = vlaneseq
    %v1743 = vshrl.u32 %v1742, 7
    %v1744 = vsub.s32 2, %v1743
    %v1745 = vrot.slane %v1732, %v1744
    %v1746 = vlaneseq
    %v1747 = vshrl.u32 %v1746, 7
    %v1748 = vsub.s32 3, %v1747
    %v1749 = vrot.slane %v1732, %v1748
    %v1882 = vunpack.c.l.b16 %v1604
    %v1883 = vunpack.c.h.b16 %v1604
    %v1884 = vunpack.c.l.b16 %v1605
    %v1885 = vunpack.c.h.b16 %v1605
    %v1886 = vunpack.c.l.b16 %v1606
    %v1887 = vunpack.c.h.b16 %v1606
    %v1888 = vunpack.c.l.b16 %v1607
    %v1889 = vunpack.c.h.b16 %v1607
    %v1890 = vunpack.c.l.b16 %v1608
    %v1891 = vunpack.c.h.b16 %v1608
    %v1892 = vunpack.c.l.b16 %v1609
    %v1893 = vunpack.c.h.b16 %v1609
    %v1894 = vunpack.c.l.b16 %v1610
    %v1895 = vunpack.c.h.b16 %v1610
    %v1896 = vunpack.c.l.b16 %v1611
    %v1897 = vunpack.c.h.b16 %v1611
    %v1898 = vunpack.c.l.b16 %v1612
    %v1899 = vunpack.c.h.b16 %v1612
    %v1900 = vunpack.c.l.b16 %v1613
    %v1901 = vunpack.c.h.b16 %v1613
    %v1902 = vunpack.c.l.b16 %v1614
    %v1903 = vunpack.c.h.b16 %v1614
    %v1904 = vunpack.c.l.b16 %v1615
    %v1905 = vunpack.c.h.b16 %v1615
    %v1906 = vunpack.c.l.b16 %v1616
    %v1907 = vunpack.c.h.b16 %v1616
    %v1908 = vunpack.c.l.b16 %v1617
    %v1909 = vunpack.c.h.b16 %v1617
    %v1910 = vunpack.c.l.b16 %v1618
    %v1911 = vunpack.c.h.b16 %v1618
    %v1912 = vunpack.c.l.b16 %v1619
    %v1913 = vunpack.c.h.b16 %v1619
    %v1914 = vunpack.c.l.b16 %v1620
    %v1915 = vunpack.c.h.b16 %v1620
    %v1916 = vunpack.c.l.b16 %v1621
    %v1917 = vunpack.c.h.b16 %v1621
    %v1918 = vunpack.c.l.b16 %v1622
    %v1919 = vunpack.c.h.b16 %v1622
    %v1920 = vunpack.c.l.b16 %v1623
    %v1921 = vunpack.c.h.b16 %v1623
    %v1922 = vunpack.c.l.b16 %v1624
    %v1923 = vunpack.c.h.b16 %v1624
    %v1924 = vunpack.c.l.b16 %v1625
    %v1925 = vunpack.c.h.b16 %v1625
    %v1926 = vunpack.c.l.b16 %v1626
    %v1927 = vunpack.c.h.b16 %v1626
    %v1928 = vunpack.c.l.b16 %v1627
    %v1929 = vunpack.c.h.b16 %v1627
    %v1930 = vunpack.c.l.b16 %v1628
    %v1931 = vunpack.c.h.b16 %v1628
    %v1932 = vunpack.c.l.b16 %v1629
    %v1933 = vunpack.c.h.b16 %v1629
    %v1934 = vunpack.c.l.b16 %v1630
    %v1935 = vunpack.c.h.b16 %v1630
    %v1936 = vunpack.c.l.b16 %v1631
    %v1937 = vunpack.c.h.b16 %v1631
    %v1938 = vunpack.c.l.b16 %v1632
    %v1939 = vunpack.c.h.b16 %v1632
    %v1940 = vunpack.c.l.b16 %v1633
    %v1941 = vunpack.c.h.b16 %v1633
    %v1942 = vunpack.c.l.b16 %v1634
    %v1943 = vunpack.c.h.b16 %v1634
    %v1944 = vunpack.c.l.b16 %v1635
    %v1945 = vunpack.c.h.b16 %v1635
    %v1946 = vunpack.c.l.b16 %v1636
    %v1947 = vunpack.c.h.b16 %v1636
    %v1948 = vunpack.c.l.b16 %v1637
    %v1949 = vunpack.c.h.b16 %v1637
    %v1950 = vunpack.c.l.b16 %v1638
    %v1951 = vunpack.c.h.b16 %v1638
    %v1952 = vunpack.c.l.b16 %v1639
    %v1953 = vunpack.c.h.b16 %v1639
    %v1954 = vunpack.c.l.b16 %v1640
    %v1955 = vunpack.c.h.b16 %v1640
    %v1956 = vunpack.c.l.b16 %v1641
    %v1957 = vunpack.c.h.b16 %v1641
    %v1958 = vunpack.c.l.b16 %v1642
    %v1959 = vunpack.c.h.b16 %v1642
    %v1960 = vunpack.c.l.b16 %v1643
    %v1961 = vunpack.c.h.b16 %v1643
    %v1962 = vunpack.c.l.b16 %v1644
    %v1963 = vunpack.c.h.b16 %v1644
    %v1964 = vunpack.c.l.b16 %v1645
    %v1965 = vunpack.c.h.b16 %v1645
    %v1966 = vunpack.c.l.b16 %v1646
    %v1967 = vunpack.c.h.b16 %v1646
    %v1968 = vunpack.c.l.b16 %v1647
    %v1969 = vunpack.c.h.b16 %v1647
    %v1970 = vunpack.c.l.b16 %v1648
    %v1971 = vunpack.c.h.b16 %v1648
    %v1972 = vunpack.c.l.b16 %v1649
    %v1973 = vunpack.c.h.b16 %v1649
    %v1974 = vunpack.c.l.b16 %v1650
    %v1975 = vunpack.c.h.b16 %v1650
    %v1976 = vunpack.c.l.b16 %v1651
    %v1977 = vunpack.c.h.b16 %v1651
    %v1978 = vunpack.c.l.b16 %v1652
    %v1979 = vunpack.c.h.b16 %v1652
    %v1980 = vunpack.c.l.b16 %v1653
    %v1981 = vunpack.c.h.b16 %v1653
    %v1982 = vunpack.c.l.b16 %v1654
    %v1983 = vunpack.c.h.b16 %v1654
    %v1984 = vunpack.c.l.b16 %v1655
    %v1985 = vunpack.c.h.b16 %v1655
    %v1986 = vunpack.c.l.b16 %v1656
    %v1987 = vunpack.c.h.b16 %v1656
    %v1988 = vunpack.c.l.b16 %v1657
    %v1989 = vunpack.c.h.b16 %v1657
    %v1990 = vunpack.c.l.b16 %v1658
    %v1991 = vunpack.c.h.b16 %v1658
    %v1992 = vunpack.c.l.b16 %v1659
    %v1993 = vunpack.c.h.b16 %v1659
    %v1994 = vunpack.c.l.b16 %v1660
    %v1995 = vunpack.c.h.b16 %v1660
    %v1996 = vunpack.c.l.b16 %v1661
    %v1997 = vunpack.c.h.b16 %v1661
    %v1998 = vunpack.c.l.b16 %v1662
    %v1999 = vunpack.c.h.b16 %v1662
    %v2000 = vunpack.c.l.b16 %v1663
    %v2001 = vunpack.c.h.b16 %v1663
    %v2002 = vunpack.c.l.b16 %v1664
    %v2003 = vunpack.c.h.b16 %v1664
    %v2004 = vunpack.c.l.b16 %v1665
    %v2005 = vunpack.c.h.b16 %v1665
    %v2006 = vunpack.c.l.b16 %v1666
    %v2007 = vunpack.c.h.b16 %v1666
    %v2008 = vunpack.c.l.b16 %v1667
    %v2009 = vunpack.c.h.b16 %v1667
    %v2010 = vunpack.c.l.b16 %v1668
    %v2011 = vunpack.c.h.b16 %v1668
    %v2012 = vunpack.c.l.b16 %v1669
    %v2013 = vunpack.c.h.b16 %v1669
    %v2014 = vunpack.c.l.b16 %v1670
    %v2015 = vunpack.c.h.b16 %v1670
    %v2016 = vunpack.c.l.b16 %v1671
    %v2017 = vunpack.c.h.b16 %v1671
    %v2018 = vunpack.c.l.b16 %v1672
    %v2019 = vunpack.c.h.b16 %v1672
    %v2020 = vunpack.c.l.b16 %v1673
    %v2021 = vunpack.c.h.b16 %v1673
    %v2022 = vunpack.c.l.b16 %v1674
    %v2023 = vunpack.c.h.b16 %v1674
    %v2024 = vunpack.c.l.b16 %v1675
    %v2025 = vunpack.c.h.b16 %v1675
    %v2026 = vunpack.c.l.b16 %v1676
    %v2027 = vunpack.c.h.b16 %v1676
    %v2028 = vunpack.c.l.b16 %v1677
    %v2029 = vunpack.c.h.b16 %v1677
    %v2030 = vunpack.c.l.b16 %v1678
    %v2031 = vunpack.c.h.b16 %v1678
    %v2032 = vunpack.c.l.b16 %v1679
    %v2033 = vunpack.c.h.b16 %v1679
    %v2034 = vunpack.c.l.b16 %v1680
    %v2035 = vunpack.c.h.b16 %v1680
    %v2036 = vunpack.c.l.b16 %v1681
    %v2037 = vunpack.c.h.b16 %v1681
    %v2038 = vunpack.c.l.b16 %v1682
    %v2039 = vunpack.c.h.b16 %v1682
    %v2040 = vunpack.c.l.b16 %v1683
    %v2041 = vunpack.c.h.b16 %v1683
    %v2042 = vunpack.c.l.b16 %v1684
    %v2043 = vunpack.c.h.b16 %v1684
    %v2044 = vunpack.c.l.b16 %v1685
    %v2045 = vunpack.c.h.b16 %v1685
    %v2046 = vunpack.c.l.b16 %v1686
    %v2047 = vunpack.c.h.b16 %v1686
    %v2048 = vunpack.c.l.b16 %v1687
    %v2049 = vunpack.c.h.b16 %v1687
    %v2050 = vunpack.c.l.b16 %v1688
    %v2051 = vunpack.c.h.b16 %v1688
    %v2052 = vunpack.c.l.b16 %v1689
    %v2053 = vunpack.c.h.b16 %v1689
    %v2054 = vunpack.c.l.b16 %v1690
    %v2055 = vunpack.c.h.b16 %v1690
    %v2056 = vunpack.c.l.b16 %v1691
    %v2057 = vunpack.c.h.b16 %v1691
    %v2058 = vunpack.c.l.b16 %v1692
    %v2059 = vunpack.c.h.b16 %v1692
    %v2060 = vunpack.c.l.b16 %v1693
    %v2061 = vunpack.c.h.b16 %v1693
    %v2062 = vunpack.c.l.b16 %v1694
    %v2063 = vunpack.c.h.b16 %v1694
    %v2064 = vunpack.c.l.b16 %v1695
    %v2065 = vunpack.c.h.b16 %v1695
    %v2066 = vunpack.c.l.b16 %v1696
    %v2067 = vunpack.c.h.b16 %v1696
    %v2068 = vunpack.c.l.b16 %v1697
    %v2069 = vunpack.c.h.b16 %v1697
    %v2070 = vunpack.c.l.b16 %v1698
    %v2071 = vunpack.c.h.b16 %v1698
    %v2072 = vunpack.c.l.b16 %v1699
    %v2073 = vunpack.c.h.b16 %v1699
    %v2074 = vunpack.c.l.b16 %v1700
    %v2075 = vunpack.c.h.b16 %v1700
    %v2076 = vunpack.c.l.b16 %v1701
    %v2077 = vunpack.c.h.b16 %v1701
    %v2078 = vunpack.c.l.b16 %v1702
    %v2079 = vunpack.c.h.b16 %v1702
    %v2080 = vunpack.c.l.b16 %v1703
    %v2081 = vunpack.c.h.b16 %v1703
    %v2082 = vunpack.c.l.b16 %v1704
    %v2083 = vunpack.c.h.b16 %v1704
    %v2084 = vunpack.c.l.b16 %v1705
    %v2085 = vunpack.c.h.b16 %v1705
    %v2086 = vunpack.c.l.b16 %v1706
    %v2087 = vunpack.c.h.b16 %v1706
    %v2088 = vunpack.c.l.b16 %v1707
    %v2089 = vunpack.c.h.b16 %v1707
    %v2090 = vunpack.c.l.b16 %v1708
    %v2091 = vunpack.c.h.b16 %v1708
    %v2092 = vunpack.c.l.b16 %v1709
    %v2093 = vunpack.c.h.b16 %v1709
    %v2094 = vunpack.c.l.b16 %v1710
    %v2095 = vunpack.c.h.b16 %v1710
    %v2096 = vunpack.c.l.b16 %v1711
    %v2097 = vunpack.c.h.b16 %v1711
    %v2098 = vunpack.c.l.b16 %v1712
    %v2099 = vunpack.c.h.b16 %v1712
    %v2100 = vunpack.c.l.b16 %v1713
    %v2101 = vunpack.c.h.b16 %v1713
    %v2102 = vunpack.c.l.b16 %v1714
    %v2103 = vunpack.c.h.b16 %v1714
    %v2104 = vunpack.c.l.b16 %v1715
    %v2105 = vunpack.c.h.b16 %v1715
    %v2106 = vunpack.c.l.b16 %v1716
    %v2107 = vunpack.c.h.b16 %v1716
    %v2108 = vunpack.c.l.b16 %v1717
    %v2109 = vunpack.c.h.b16 %v1717
    %v2110 = vunpack.c.l.b16 %v1718
    %v2111 = vunpack.c.h.b16 %v1718
    %v2112 = vunpack.c.l.b16 %v1719
    %v2113 = vunpack.c.h.b16 %v1719
    %v2114 = vunpack.c.l.b16 %v1720
    %v2115 = vunpack.c.h.b16 %v1720
    %v2116 = vunpack.c.l.b16 %v1721
    %v2117 = vunpack.c.h.b16 %v1721
    %v2118 = vunpack.c.l.b16 %v1722
    %v2119 = vunpack.c.h.b16 %v1722
    %v2120 = vunpack.c.l.b16 %v1723
    %v2121 = vunpack.c.h.b16 %v1723
    %v2122 = vunpack.c.l.b16 %v1724
    %v2123 = vunpack.c.h.b16 %v1724
    %v2124 = vunpack.c.l.b16 %v1725
    %v2125 = vunpack.c.h.b16 %v1725
    %v2126 = vunpack.c.l.b16 %v1726
    %v2127 = vunpack.c.h.b16 %v1726
    %v2128 = vunpack.c.l.b16 %v1727
    %v2129 = vunpack.c.h.b16 %v1727
    %v2130 = vunpack.c.l.b16 %v1728
    %v2131 = vunpack.c.h.b16 %v1728
    %v2132 = vunpack.c.l.b16 %v1729
    %v2133 = vunpack.c.h.b16 %v1729
    %v2134 = vunpack.c.l.b16 %v1730
    %v2135 = vunpack.c.h.b16 %v1730
    %v2136 = vunpack.c.l.b16 %v1731
    %v2137 = vunpack.c.h.b16 %v1731
    %v2138 = vpack.c.b16 %v1886, %v1882
    %v2139 = vpack.c.b16 %v1887, %v1883
    %v2140 = vpack.c.b16 %v1888, %v1884
    %v2141 = vpack.c.b16 %v1889, %v1885
    %v2142 = vpack.c.b16 %v1894, %v1890
    %v2143 = vpack.c.b16 %v1895, %v1891
    %v2144 = vpack.c.b16 %v1896, %v1892
    %v2145 = vpack.c.b16 %v1897, %v1893
    %v2146 = vpack.c.b16 %v1902, %v1898
    %v2147 = vpack.c.b16 %v1903, %v1899
    %v2148 = vpack.c.b16 %v1904, %v1900
    %v2149 = vpack.c.b16 %v1905, %v1901
    %v2150 = vpack.c.b16 %v1910, %v1906
    %v2151 = vpack.c.b16 %v1911, %v1907
    %v2152 = vpack.c.b16 %v1912, %v1908
    %v2153 = vpack.c.b16 %v1913, %v1909
    %v2154 = vpack.c.b16 %v1918, %v1914
    %v2155 = vpack.c.b16 %v1919, %v1915
    %v2156 = vpack.c.b16 %v1920, %v1916
    %v2157 = vpack.c.b16 %v1921, %v1917
    %v2158 = vpack.c.b16 %v1926, %v1922
    %v2159 = vpack.c.b16 %v1927, %v1923
    %v2160 = vpack.c.b16 %v1928, %v1924
    %v2161 = vpack.c.b16 %v1929, %v1925
    %v2162 = vpack.c.b16 %v1934, %v1930
    %v2163 = vpack.c.b16 %v1935, %v1931
    %v2164 = vpack.c.b16 %v1936, %v1932
    %v2165 = vpack.c.b16 %v1937, %v1933
    %v2166 = vpack.c.b16 %v1942, %v1938
    %v2167 = vpack.c.b16 %v1943, %v1939
    %v2168 = vpack.c.b16 %v1944, %v1940
    %v2169 = vpack.c.b16 %v1945, %v1941
    %v2170 = vpack.c.b16 %v1950, %v1946
    %v2171 = vpack.c.b16 %v1951, %v1947
    %v2172 = vpack.c.b16 %v1952, %v1948
    %v2173 = vpack.c.b16 %v1953, %v1949
    %v2174 = vpack.c.b16 %v1958, %v1954
    %v2175 = vpack.c.b16 %v1959, %v1955
    %v2176 = vpack.c.b16 %v1960, %v1956
    %v2177 = vpack.c.b16 %v1961, %v1957
    %v2178 = vpack.c.b16 %v1966, %v1962
    %v2179 = vpack.c.b16 %v1967, %v1963
    %v2180 = vpack.c.b16 %v1968, %v1964
    %v2181 = vpack.c.b16 %v1969, %v1965
    %v2182 = vpack.c.b16 %v1974, %v1970
    %v2183 = vpack.c.b16 %v1975, %v1971
    %v2184 = vpack.c.b16 %v1976, %v1972
    %v2185 = vpack.c.b16 %v1977, %v1973
    %v2186 = vpack.c.b16 %v1982, %v1978
    %v2187 = vpack.c.b16 %v1983, %v1979
    %v2188 = vpack.c.b16 %v1984, %v1980
    %v2189 = vpack.c.b16 %v1985, %v1981
    %v2190 = vpack.c.b16 %v1990, %v1986
    %v2191 = vpack.c.b16 %v1991, %v1987
    %v2192 = vpack.c.b16 %v1992, %v1988
    %v2193 = vpack.c.b16 %v1993, %v1989
    %v2194 = vpack.c.b16 %v1998, %v1994
    %v2195 = vpack.c.b16 %v1999, %v1995
    %v2196 = vpack.c.b16 %v2000, %v1996
    %v2197 = vpack.c.b16 %v2001, %v1997
    %v2198 = vpack.c.b16 %v2006, %v2002
    %v2199 = vpack.c.b16 %v2007, %v2003
    %v2200 = vpack.c.b16 %v2008, %v2004
    %v2201 = vpack.c.b16 %v2009, %v2005
    %v2202 = vpack.c.b16 %v2014, %v2010
    %v2203 = vpack.c.b16 %v2015, %v2011
    %v2204 = vpack.c.b16 %v2016, %v2012
    %v2205 = vpack.c.b16 %v2017, %v2013
    %v2206 = vpack.c.b16 %v2022, %v2018
    %v2207 = vpack.c.b16 %v2023, %v2019
    %v2208 = vpack.c.b16 %v2024, %v2020
    %v2209 = vpack.c.b16 %v2025, %v2021
    %v2210 = vpack.c.b16 %v2030, %v2026
    %v2211 = vpack.c.b16 %v2031, %v2027
    %v2212 = vpack.c.b16 %v2032, %v2028
    %v2213 = vpack.c.b16 %v2033, %v2029
    %v2214 = vpack.c.b16 %v2038, %v2034
    %v2215 = vpack.c.b16 %v2039, %v2035
    %v2216 = vpack.c.b16 %v2040, %v2036
    %v2217 = vpack.c.b16 %v2041, %v2037
    %v2218 = vpack.c.b16 %v2046, %v2042
    %v2219 = vpack.c.b16 %v2047, %v2043
    %v2220 = vpack.c.b16 %v2048, %v2044
    %v2221 = vpack.c.b16 %v2049, %v2045
    %v2222 = vpack.c.b16 %v2054, %v2050
    %v2223 = vpack.c.b16 %v2055, %v2051
    %v2224 = vpack.c.b16 %v2056, %v2052
    %v2225 = vpack.c.b16 %v2057, %v2053
    %v2226 = vpack.c.b16 %v2062, %v2058
    %v2227 = vpack.c.b16 %v2063, %v2059
    %v2228 = vpack.c.b16 %v2064, %v2060
    %v2229 = vpack.c.b16 %v2065, %v2061
    %v2230 = vpack.c.b16 %v2070, %v2066
    %v2231 = vpack.c.b16 %v2071, %v2067
    %v2232 = vpack.c.b16 %v2072, %v2068
    %v2233 = vpack.c.b16 %v2073, %v2069
    %v2234 = vpack.c.b16 %v2078, %v2074
    %v2235 = vpack.c.b16 %v2079, %v2075
    %v2236 = vpack.c.b16 %v2080, %v2076
    %v2237 = vpack.c.b16 %v2081, %v2077
    %v2238 = vpack.c.b16 %v2086, %v2082
    %v2239 = vpack.c.b16 %v2087, %v2083
    %v2240 = vpack.c.b16 %v2088, %v2084
    %v2241 = vpack.c.b16 %v2089, %v2085
    %v2242 = vpack.c.b16 %v2094, %v2090
    %v2243 = vpack.c.b16 %v2095, %v2091
    %v2244 = vpack.c.b16 %v2096, %v2092
    %v2245 = vpack.c.b16 %v2097, %v2093
    %v2246 = vpack.c.b16 %v2102, %v2098
    %v2247 = vpack.c.b16 %v2103, %v2099
    %v2248 = vpack.c.b16 %v2104, %v2100
    %v2249 = vpack.c.b16 %v2105, %v2101
    %v2250 = vpack.c.b16 %v2110, %v2106
    %v2251 = vpack.c.b16 %v2111, %v2107
    %v2252 = vpack.c.b16 %v2112, %v2108
    %v2253 = vpack.c.b16 %v2113, %v2109
    %v2254 = vpack.c.b16 %v2118, %v2114
    %v2255 = vpack.c.b16 %v2119, %v2115
    %v2256 = vpack.c.b16 %v2120, %v2116
    %v2257 = vpack.c.b16 %v2121, %v2117
    %v2258 = vpack.c.b16 %v2126, %v2122
    %v2259 = vpack.c.b16 %v2127, %v2123
    %v2260 = vpack.c.b16 %v2128, %v2124
    %v2261 = vpack.c.b16 %v2129, %v2125
    %v2262 = vpack.c.b16 %v2134, %v2130
    %v2263 = vpack.c.b16 %v2135, %v2131
    %v2264 = vpack.c.b16 %v2136, %v2132
    %v2265 = vpack.c.b16 %v2137, %v2133
    %2394 = vmatprep.subr.bf16.mxu0 %v2167
    %2395 = vmatpush1.bf16.msra.mxu0 %v2166
    %2396 = vmatprep.subr.bf16.mxu0 %v2163
    %2397 = vmatpush1.bf16.msra.mxu0 %v2162
    %2398 = vmatprep.subr.bf16.mxu0 %v2159
    %2399 = vmatpush1.bf16.msra.mxu0 %v2158
    %2400 = vmatprep.subr.bf16.mxu0 %v2155
    %2401 = vmatpush1.bf16.msra.mxu0 %v2154
    %2402 = vmatprep.subr.bf16.mxu0 %v2151
    %2403 = vmatpush1.bf16.msra.mxu0 %v2150
    %2404 = vmatprep.subr.bf16.mxu0 %v2147
    %2405 = vmatpush1.bf16.msra.mxu0 %v2146
    %2406 = vmatprep.subr.bf16.mxu0 %v2143
    %2407 = vmatpush1.bf16.msra.mxu0 %v2142
    %2408 = vmatprep.subr.bf16.mxu0 %v2139
    %2409 = vmatpush1.bf16.msra.mxu0 %v2138
    %2410 = vmatprep.subr.bf16.mxu0 %v2199
    %2411 = vmatpush2.bf16.msra.mxu0 %v2198
    %2412 = vmatprep.subr.bf16.mxu0 %v2195
    %2413 = vmatpush2.bf16.msra.mxu0 %v2194
    %2414 = vmatprep.subr.bf16.mxu0 %v2191
    %2415 = vmatpush2.bf16.msra.mxu0 %v2190
    %2416 = vmatprep.subr.bf16.mxu0 %v2187
    %2417 = vmatpush2.bf16.msra.mxu0 %v2186
    %2418 = vmatprep.subr.bf16.mxu0 %v2183
    %2419 = vmatpush2.bf16.msra.mxu0 %v2182
    %2420 = vmatprep.subr.bf16.mxu0 %v2179
    %2421 = vmatpush2.bf16.msra.mxu0 %v2178
    %2422 = vmatprep.subr.bf16.mxu0 %v2175
    %2423 = vmatpush2.bf16.msra.mxu0 %v2174
    %2424 = vmatprep.subr.bf16.mxu0 %v2171
    %2425 = vmatpush2.bf16.msra.mxu0 %v2170
    %2426 = vmatprep.mubr.bf16.mxu0 %v1601
    %2427 = vmatmul.mubr.bf16.gmra.mxu0 %v1600
    %v2428 = vpop.f32.mrf.mxu0
    %v2429 = vadd.f32 %v1737, %v2428
    %v2430 = vpop.f32.mrf.mxu0
    %v2431 = vadd.f32 %v1741, %v2430
    %v2432 = vpop.f32.mrf.mxu0
    %v2433 = vpop.f32.mrf.mxu0
    %2434 = vdwg.mxu0
    %2435 = vmatprep.subr.bf16.mxu0 %v2231
    %2436 = vmatpush1.bf16.msra.mxu0 %v2230
    %2437 = vmatprep.subr.bf16.mxu0 %v2227
    %2438 = vmatpush1.bf16.msra.mxu0 %v2226
    %2439 = vmatprep.subr.bf16.mxu0 %v2223
    %2440 = vmatpush1.bf16.msra.mxu0 %v2222
    %2441 = vmatprep.subr.bf16.mxu0 %v2219
    %2442 = vmatpush1.bf16.msra.mxu0 %v2218
    %2443 = vmatprep.subr.bf16.mxu0 %v2215
    %2444 = vmatpush1.bf16.msra.mxu0 %v2214
    %2445 = vmatprep.subr.bf16.mxu0 %v2211
    %2446 = vmatpush1.bf16.msra.mxu0 %v2210
    %2447 = vmatprep.subr.bf16.mxu0 %v2207
    %2448 = vmatpush1.bf16.msra.mxu0 %v2206
    %2449 = vmatprep.subr.bf16.mxu0 %v2203
    %2450 = vmatpush1.bf16.msra.mxu0 %v2202
    %2451 = vmatprep.subr.bf16.mxu0 %v2263
    %2452 = vmatpush2.bf16.msra.mxu0 %v2262
    %2453 = vmatprep.subr.bf16.mxu0 %v2259
    %2454 = vmatpush2.bf16.msra.mxu0 %v2258
    %2455 = vmatprep.subr.bf16.mxu0 %v2255
    %2456 = vmatpush2.bf16.msra.mxu0 %v2254
    %2457 = vmatprep.subr.bf16.mxu0 %v2251
    %2458 = vmatpush2.bf16.msra.mxu0 %v2250
    %2459 = vmatprep.subr.bf16.mxu0 %v2247
    %2460 = vmatpush2.bf16.msra.mxu0 %v2246
    %2461 = vmatprep.subr.bf16.mxu0 %v2243
    %2462 = vmatpush2.bf16.msra.mxu0 %v2242
    %2463 = vmatprep.subr.bf16.mxu0 %v2239
    %2464 = vmatpush2.bf16.msra.mxu0 %v2238
    %2465 = vmatprep.subr.bf16.mxu0 %v2235
    %2466 = vmatpush2.bf16.msra.mxu0 %v2234
    %2467 = vmatprep.mubr.bf16.mxu0 %v1603
    %2468 = vmatmul.mubr.bf16.gmra.mxu0 %v1602
    %v2469 = vpop.f32.mrf.mxu0
    %v2470 = vadd.f32 %v2429, %v2469
    %v2471 = vpop.f32.mrf.mxu0
    %v2472 = vadd.f32 %v2431, %v2471
    %v2473 = vpop.f32.mrf.mxu0
    %v2474 = vpop.f32.mrf.mxu0
    %2475 = vdwg.mxu0
    %2476 = vmatprep.subr.bf16.mxu0 %v2169
    %2477 = vmatpush1.bf16.msra.mxu0 %v2168
    %2478 = vmatprep.subr.bf16.mxu0 %v2165
    %2479 = vmatpush1.bf16.msra.mxu0 %v2164
    %2480 = vmatprep.subr.bf16.mxu0 %v2161
    %2481 = vmatpush1.bf16.msra.mxu0 %v2160
    %2482 = vmatprep.subr.bf16.mxu0 %v2157
    %2483 = vmatpush1.bf16.msra.mxu0 %v2156
    %2484 = vmatprep.subr.bf16.mxu0 %v2153
    %2485 = vmatpush1.bf16.msra.mxu0 %v2152
    %2486 = vmatprep.subr.bf16.mxu0 %v2149
    %2487 = vmatpush1.bf16.msra.mxu0 %v2148
    %2488 = vmatprep.subr.bf16.mxu0 %v2145
    %2489 = vmatpush1.bf16.msra.mxu0 %v2144
    %2490 = vmatprep.subr.bf16.mxu0 %v2141
    %2491 = vmatpush1.bf16.msra.mxu0 %v2140
    %2492 = vmatprep.subr.bf16.mxu0 %v2201
    %2493 = vmatpush2.bf16.msra.mxu0 %v2200
    %2494 = vmatprep.subr.bf16.mxu0 %v2197
    %2495 = vmatpush2.bf16.msra.mxu0 %v2196
    %2496 = vmatprep.subr.bf16.mxu0 %v2193
    %2497 = vmatpush2.bf16.msra.mxu0 %v2192
    %2498 = vmatprep.subr.bf16.mxu0 %v2189
    %2499 = vmatpush2.bf16.msra.mxu0 %v2188
    %2500 = vmatprep.subr.bf16.mxu0 %v2185
    %2501 = vmatpush2.bf16.msra.mxu0 %v2184
    %2502 = vmatprep.subr.bf16.mxu0 %v2181
    %2503 = vmatpush2.bf16.msra.mxu0 %v2180
    %2504 = vmatprep.subr.bf16.mxu0 %v2177
    %2505 = vmatpush2.bf16.msra.mxu0 %v2176
    %2506 = vmatprep.subr.bf16.mxu0 %v2173
    %2507 = vmatpush2.bf16.msra.mxu0 %v2172
    %2508 = vmatprep.mubr.bf16.mxu0 %v1601
    %2509 = vmatmul.mubr.bf16.gmra.mxu0 %v1600
    %v2510 = vpop.f32.mrf.mxu0
    %v2511 = vadd.f32 %v1745, %v2510
    %v2512 = vpop.f32.mrf.mxu0
    %v2513 = vadd.f32 %v1749, %v2512
    %v2514 = vpop.f32.mrf.mxu0
    %v2515 = vpop.f32.mrf.mxu0
    %2516 = vdwg.mxu0
    %2517 = vmatprep.subr.bf16.mxu0 %v2233
    %2518 = vmatpush1.bf16.msra.mxu0 %v2232
    %2519 = vmatprep.subr.bf16.mxu0 %v2229
    %2520 = vmatpush1.bf16.msra.mxu0 %v2228
    %2521 = vmatprep.subr.bf16.mxu0 %v2225
    %2522 = vmatpush1.bf16.msra.mxu0 %v2224
    %2523 = vmatprep.subr.bf16.mxu0 %v2221
    %2524 = vmatpush1.bf16.msra.mxu0 %v2220
    %2525 = vmatprep.subr.bf16.mxu0 %v2217
    %2526 = vmatpush1.bf16.msra.mxu0 %v2216
    %2527 = vmatprep.subr.bf16.mxu0 %v2213
    %2528 = vmatpush1.bf16.msra.mxu0 %v2212
    %2529 = vmatprep.subr.bf16.mxu0 %v2209
    %2530 = vmatpush1.bf16.msra.mxu0 %v2208
    %2531 = vmatprep.subr.bf16.mxu0 %v2205
    %2532 = vmatpush1.bf16.msra.mxu0 %v2204
    %2533 = vmatprep.subr.bf16.mxu0 %v2265
    %2534 = vmatpush2.bf16.msra.mxu0 %v2264
    %2535 = vmatprep.subr.bf16.mxu0 %v2261
    %2536 = vmatpush2.bf16.msra.mxu0 %v2260
    %2537 = vmatprep.subr.bf16.mxu0 %v2257
    %2538 = vmatpush2.bf16.msra.mxu0 %v2256
    %2539 = vmatprep.subr.bf16.mxu0 %v2253
    %2540 = vmatpush2.bf16.msra.mxu0 %v2252
    %2541 = vmatprep.subr.bf16.mxu0 %v2249
    %2542 = vmatpush2.bf16.msra.mxu0 %v2248
    %2543 = vmatprep.subr.bf16.mxu0 %v2245
    %2544 = vmatpush2.bf16.msra.mxu0 %v2244
    %2545 = vmatprep.subr.bf16.mxu0 %v2241
    %2546 = vmatpush2.bf16.msra.mxu0 %v2240
    %2547 = vmatprep.subr.bf16.mxu0 %v2237
    %2548 = vmatpush2.bf16.msra.mxu0 %v2236
    %2549 = vmatprep.mubr.bf16.mxu0 %v1603
    %2550 = vmatmul.mubr.bf16.gmra.mxu0 %v1602
    %v2551 = vpop.f32.mrf.mxu0
    %v2552 = vadd.f32 %v2511, %v2551
    %v2553 = vpop.f32.mrf.mxu0
    %v2554 = vadd.f32 %v2513, %v2553
    %v2555 = vpop.f32.mrf.mxu0
    %v2556 = vpop.f32.mrf.mxu0
    %2557 = vdwg.mxu0
    %v2558 = vmax.f32 %v2470, 0.0
    %v2559 = vmax.f32 %v2472, 0.0
    %v2560 = vmax.f32 %v2552, 0.0
    %v2561 = vmax.f32 %v2554, 0.0
    %v2562 = vpack.c.bf16 %v2558, %v2558
    %v2563 = vpack.c.bf16 %v2559, %v2559
    %v2564 = vpack.c.bf16 %v2560, %v2560
    %v2565 = vpack.c.bf16 %v2561, %v2561
    %v2566 = vld [vmem:[%s5] sm:$0xf]
    %v2567 = vld [vmem:[%s5 + $0x4] sm:$0xf]
    %v2568 = vld [vmem:[%s5 + $0x8] sm:$0xf]
    %v2569 = vld [vmem:[%s5 + $0xc] sm:$0xf]
    %v2570 = vld [vmem:[%s5 + $0x10] sm:$0xf]
    %v2571 = vld [vmem:[%s5 + $0x14] sm:$0xf]
    %v2572 = vld [vmem:[%s5 + $0x18] sm:$0xf]
    %v2573 = vld [vmem:[%s5 + $0x1c] sm:$0xf]
    %v2574 = vld [vmem:[%s5 + $0x20] sm:$0xf]
    %v2575 = vld [vmem:[%s5 + $0x24] sm:$0xf]
    %v2576 = vld [vmem:[%s5 + $0x28] sm:$0xf]
    %v2577 = vld [vmem:[%s5 + $0x2c] sm:$0xf]
    %v2578 = vld [vmem:[%s5 + $0x30] sm:$0xf]
    %v2579 = vld [vmem:[%s5 + $0x34] sm:$0xf]
    %v2580 = vld [vmem:[%s5 + $0x38] sm:$0xf]
    %v2581 = vld [vmem:[%s5 + $0x3c] sm:$0xf]
    %v2582 = vld [vmem:[%s5 + $0x40] sm:$0xf]
    %v2583 = vld [vmem:[%s5 + $0x44] sm:$0xf]
    %v2584 = vld [vmem:[%s5 + $0x48] sm:$0xf]
    %v2585 = vld [vmem:[%s5 + $0x4c] sm:$0xf]
    %v2586 = vld [vmem:[%s5 + $0x50] sm:$0xf]
    %v2587 = vld [vmem:[%s5 + $0x54] sm:$0xf]
    %v2588 = vld [vmem:[%s5 + $0x58] sm:$0xf]
    %v2589 = vld [vmem:[%s5 + $0x5c] sm:$0xf]
    %v2590 = vld [vmem:[%s5 + $0x60] sm:$0xf]
    %v2591 = vld [vmem:[%s5 + $0x64] sm:$0xf]
    %v2592 = vld [vmem:[%s5 + $0x68] sm:$0xf]
    %v2593 = vld [vmem:[%s5 + $0x6c] sm:$0xf]
    %v2594 = vld [vmem:[%s5 + $0x70] sm:$0xf]
    %v2595 = vld [vmem:[%s5 + $0x74] sm:$0xf]
    %v2596 = vld [vmem:[%s5 + $0x78] sm:$0xf]
    %v2597 = vld [vmem:[%s5 + $0x7c] sm:$0xf]
    %v2598 = vld [vmem:[%s5 + $0x80] sm:$0xf]
    %v2599 = vld [vmem:[%s5 + $0x84] sm:$0xf]
    %v2600 = vld [vmem:[%s5 + $0x88] sm:$0xf]
    %v2601 = vld [vmem:[%s5 + $0x8c] sm:$0xf]
    %v2602 = vld [vmem:[%s5 + $0x90] sm:$0xf]
    %v2603 = vld [vmem:[%s5 + $0x94] sm:$0xf]
    %v2604 = vld [vmem:[%s5 + $0x98] sm:$0xf]
    %v2605 = vld [vmem:[%s5 + $0x9c] sm:$0xf]
    %v2606 = vld [vmem:[%s5 + $0xa0] sm:$0xf]
    %v2607 = vld [vmem:[%s5 + $0xa4] sm:$0xf]
    %v2608 = vld [vmem:[%s5 + $0xa8] sm:$0xf]
    %v2609 = vld [vmem:[%s5 + $0xac] sm:$0xf]
    %v2610 = vld [vmem:[%s5 + $0xb0] sm:$0xf]
    %v2611 = vld [vmem:[%s5 + $0xb4] sm:$0xf]
    %v2612 = vld [vmem:[%s5 + $0xb8] sm:$0xf]
    %v2613 = vld [vmem:[%s5 + $0xbc] sm:$0xf]
    %v2614 = vld [vmem:[%s5 + $0xc0] sm:$0xf]
    %v2615 = vld [vmem:[%s5 + $0xc4] sm:$0xf]
    %v2616 = vld [vmem:[%s5 + $0xc8] sm:$0xf]
    %v2617 = vld [vmem:[%s5 + $0xcc] sm:$0xf]
    %v2618 = vld [vmem:[%s5 + $0xd0] sm:$0xf]
    %v2619 = vld [vmem:[%s5 + $0xd4] sm:$0xf]
    %v2620 = vld [vmem:[%s5 + $0xd8] sm:$0xf]
    %v2621 = vld [vmem:[%s5 + $0xdc] sm:$0xf]
    %v2622 = vld [vmem:[%s5 + $0xe0] sm:$0xf]
    %v2623 = vld [vmem:[%s5 + $0xe4] sm:$0xf]
    %v2624 = vld [vmem:[%s5 + $0xe8] sm:$0xf]
    %v2625 = vld [vmem:[%s5 + $0xec] sm:$0xf]
    %v2626 = vld [vmem:[%s5 + $0xf0] sm:$0xf]
    %v2627 = vld [vmem:[%s5 + $0xf4] sm:$0xf]
    %v2628 = vld [vmem:[%s5 + $0xf8] sm:$0xf]
    %v2629 = vld [vmem:[%s5 + $0xfc] sm:$0xf]
    %v2694 = vunpack.c.l.b16 %v2566
    %v2695 = vunpack.c.l.b16 %v2567
    %v2696 = vunpack.c.l.b16 %v2568
    %v2697 = vunpack.c.l.b16 %v2569
    %v2698 = vunpack.c.l.b16 %v2570
    %v2699 = vunpack.c.l.b16 %v2571
    %v2700 = vunpack.c.l.b16 %v2572
    %v2701 = vunpack.c.l.b16 %v2573
    %v2702 = vunpack.c.l.b16 %v2574
    %v2703 = vunpack.c.l.b16 %v2575
    %v2704 = vunpack.c.l.b16 %v2576
    %v2705 = vunpack.c.l.b16 %v2577
    %v2706 = vunpack.c.l.b16 %v2578
    %v2707 = vunpack.c.l.b16 %v2579
    %v2708 = vunpack.c.l.b16 %v2580
    %v2709 = vunpack.c.l.b16 %v2581
    %v2710 = vunpack.c.l.b16 %v2582
    %v2711 = vunpack.c.l.b16 %v2583
    %v2712 = vunpack.c.l.b16 %v2584
    %v2713 = vunpack.c.l.b16 %v2585
    %v2714 = vunpack.c.l.b16 %v2586
    %v2715 = vunpack.c.l.b16 %v2587
    %v2716 = vunpack.c.l.b16 %v2588
    %v2717 = vunpack.c.l.b16 %v2589
    %v2718 = vunpack.c.l.b16 %v2590
    %v2719 = vunpack.c.l.b16 %v2591
    %v2720 = vunpack.c.l.b16 %v2592
    %v2721 = vunpack.c.l.b16 %v2593
    %v2722 = vunpack.c.l.b16 %v2594
    %v2723 = vunpack.c.l.b16 %v2595
    %v2724 = vunpack.c.l.b16 %v2596
    %v2725 = vunpack.c.l.b16 %v2597
    %v2726 = vunpack.c.l.b16 %v2598
    %v2727 = vunpack.c.l.b16 %v2599
    %v2728 = vunpack.c.l.b16 %v2600
    %v2729 = vunpack.c.l.b16 %v2601
    %v2730 = vunpack.c.l.b16 %v2602
    %v2731 = vunpack.c.l.b16 %v2603
    %v2732 = vunpack.c.l.b16 %v2604
    %v2733 = vunpack.c.l.b16 %v2605
    %v2734 = vunpack.c.l.b16 %v2606
    %v2735 = vunpack.c.l.b16 %v2607
    %v2736 = vunpack.c.l.b16 %v2608
    %v2737 = vunpack.c.l.b16 %v2609
    %v2738 = vunpack.c.l.b16 %v2610
    %v2739 = vunpack.c.l.b16 %v2611
    %v2740 = vunpack.c.l.b16 %v2612
    %v2741 = vunpack.c.l.b16 %v2613
    %v2742 = vunpack.c.l.b16 %v2614
    %v2743 = vunpack.c.l.b16 %v2615
    %v2744 = vunpack.c.l.b16 %v2616
    %v2745 = vunpack.c.l.b16 %v2617
    %v2746 = vunpack.c.l.b16 %v2618
    %v2747 = vunpack.c.l.b16 %v2619
    %v2748 = vunpack.c.l.b16 %v2620
    %v2749 = vunpack.c.l.b16 %v2621
    %v2750 = vunpack.c.l.b16 %v2622
    %v2751 = vunpack.c.l.b16 %v2623
    %v2752 = vunpack.c.l.b16 %v2624
    %v2753 = vunpack.c.l.b16 %v2625
    %v2754 = vunpack.c.l.b16 %v2626
    %v2755 = vunpack.c.l.b16 %v2627
    %v2756 = vunpack.c.l.b16 %v2628
    %v2757 = vunpack.c.l.b16 %v2629
    %v2758 = vpack.c.b16 %v2695, %v2694
    %v2759 = vpack.c.b16 %v2697, %v2696
    %v2760 = vpack.c.b16 %v2699, %v2698
    %v2761 = vpack.c.b16 %v2701, %v2700
    %v2762 = vpack.c.b16 %v2703, %v2702
    %v2763 = vpack.c.b16 %v2705, %v2704
    %v2764 = vpack.c.b16 %v2707, %v2706
    %v2765 = vpack.c.b16 %v2709, %v2708
    %v2766 = vpack.c.b16 %v2711, %v2710
    %v2767 = vpack.c.b16 %v2713, %v2712
    %v2768 = vpack.c.b16 %v2715, %v2714
    %v2769 = vpack.c.b16 %v2717, %v2716
    %v2770 = vpack.c.b16 %v2719, %v2718
    %v2771 = vpack.c.b16 %v2721, %v2720
    %v2772 = vpack.c.b16 %v2723, %v2722
    %v2773 = vpack.c.b16 %v2725, %v2724
    %v2774 = vpack.c.b16 %v2727, %v2726
    %v2775 = vpack.c.b16 %v2729, %v2728
    %v2776 = vpack.c.b16 %v2731, %v2730
    %v2777 = vpack.c.b16 %v2733, %v2732
    %v2778 = vpack.c.b16 %v2735, %v2734
    %v2779 = vpack.c.b16 %v2737, %v2736
    %v2780 = vpack.c.b16 %v2739, %v2738
    %v2781 = vpack.c.b16 %v2741, %v2740
    %v2782 = vpack.c.b16 %v2743, %v2742
    %v2783 = vpack.c.b16 %v2745, %v2744
    %v2784 = vpack.c.b16 %v2747, %v2746
    %v2785 = vpack.c.b16 %v2749, %v2748
    %v2786 = vpack.c.b16 %v2751, %v2750
    %v2787 = vpack.c.b16 %v2753, %v2752
    %v2788 = vpack.c.b16 %v2755, %v2754
    %v2789 = vpack.c.b16 %v2757, %v2756
    %2822 = vmatprep.subr.bf16.mxu0 0
    %2823 = vmatpush1.bf16.msra.mxu0 %v2765
    %2824 = vmatprep.subr.bf16.mxu0 0
    %2825 = vmatpush1.bf16.msra.mxu0 %v2764
    %2826 = vmatprep.subr.bf16.mxu0 0
    %2827 = vmatpush1.bf16.msra.mxu0 %v2763
    %2828 = vmatprep.subr.bf16.mxu0 0
    %2829 = vmatpush1.bf16.msra.mxu0 %v2762
    %2830 = vmatprep.subr.bf16.mxu0 0
    %2831 = vmatpush1.bf16.msra.mxu0 %v2761
    %2832 = vmatprep.subr.bf16.mxu0 0
    %2833 = vmatpush1.bf16.msra.mxu0 %v2760
    %2834 = vmatprep.subr.bf16.mxu0 0
    %2835 = vmatpush1.bf16.msra.mxu0 %v2759
    %2836 = vmatprep.subr.bf16.mxu0 0
    %2837 = vmatpush1.bf16.msra.mxu0 %v2758
    %2838 = vmatprep.subr.bf16.mxu0 0
    %2839 = vmatpush2.bf16.msra.mxu0 %v2773
    %2840 = vmatprep.subr.bf16.mxu0 0
    %2841 = vmatpush2.bf16.msra.mxu0 %v2772
    %2842 = vmatprep.subr.bf16.mxu0 0
    %2843 = vmatpush2.bf16.msra.mxu0 %v2771
    %2844 = vmatprep.subr.bf16.mxu0 0
    %2845 = vmatpush2.bf16.msra.mxu0 %v2770
    %2846 = vmatprep.subr.bf16.mxu0 0
    %2847 = vmatpush2.bf16.msra.mxu0 %v2769
    %2848 = vmatprep.subr.bf16.mxu0 0
    %2849 = vmatpush2.bf16.msra.mxu0 %v2768
    %2850 = vmatprep.subr.bf16.mxu0 0
    %2851 = vmatpush2.bf16.msra.mxu0 %v2767
    %2852 = vmatprep.subr.bf16.mxu0 0
    %2853 = vmatpush2.bf16.msra.mxu0 %v2766
    %2854 = vmatprep.mubr.bf16.mxu0 %v2563
    %2855 = vmatmul.mubr.bf16.gmra.mxu0 %v2562
    %v2856 = vpop.f32.mrf.mxu0
    %v2857 = vadd.f32 0.0, %v2856
    %v2858 = vpop.f32.mrf.mxu0
    %v2859 = vpop.f32.mrf.mxu0
    %v2860 = vpop.f32.mrf.mxu0
    %2861 = vdwg.mxu0
    %2862 = vmatprep.subr.bf16.mxu0 0
    %2863 = vmatpush1.bf16.msra.mxu0 %v2781
    %2864 = vmatprep.subr.bf16.mxu0 0
    %2865 = vmatpush1.bf16.msra.mxu0 %v2780
    %2866 = vmatprep.subr.bf16.mxu0 0
    %2867 = vmatpush1.bf16.msra.mxu0 %v2779
    %2868 = vmatprep.subr.bf16.mxu0 0
    %2869 = vmatpush1.bf16.msra.mxu0 %v2778
    %2870 = vmatprep.subr.bf16.mxu0 0
    %2871 = vmatpush1.bf16.msra.mxu0 %v2777
    %2872 = vmatprep.subr.bf16.mxu0 0
    %2873 = vmatpush1.bf16.msra.mxu0 %v2776
    %2874 = vmatprep.subr.bf16.mxu0 0
    %2875 = vmatpush1.bf16.msra.mxu0 %v2775
    %2876 = vmatprep.subr.bf16.mxu0 0
    %2877 = vmatpush1.bf16.msra.mxu0 %v2774
    %2878 = vmatprep.subr.bf16.mxu0 0
    %2879 = vmatpush2.bf16.msra.mxu0 %v2789
    %2880 = vmatprep.subr.bf16.mxu0 0
    %2881 = vmatpush2.bf16.msra.mxu0 %v2788
    %2882 = vmatprep.subr.bf16.mxu0 0
    %2883 = vmatpush2.bf16.msra.mxu0 %v2787
    %2884 = vmatprep.subr.bf16.mxu0 0
    %2885 = vmatpush2.bf16.msra.mxu0 %v2786
    %2886 = vmatprep.subr.bf16.mxu0 0
    %2887 = vmatpush2.bf16.msra.mxu0 %v2785
    %2888 = vmatprep.subr.bf16.mxu0 0
    %2889 = vmatpush2.bf16.msra.mxu0 %v2784
    %2890 = vmatprep.subr.bf16.mxu0 0
    %2891 = vmatpush2.bf16.msra.mxu0 %v2783
    %2892 = vmatprep.subr.bf16.mxu0 0
    %2893 = vmatpush2.bf16.msra.mxu0 %v2782
    %2894 = vmatprep.mubr.bf16.mxu0 %v2565
    %2895 = vmatmul.mubr.bf16.gmra.mxu0 %v2564
    %v2896 = vpop.f32.mrf.mxu0
    %v2897 = vadd.f32 %v2857, %v2896
    %v2898 = vpop.f32.mrf.mxu0
    %v2899 = vpop.f32.mrf.mxu0
    %v2900 = vpop.f32.mrf.mxu0
    %2901 = vdwg.mxu0
    %v2902 = vpack.c.bf16 %v2897, %v2897
    %2903 = vst [vmem:[%s6] sm:$0xf] %v2902
    // Predicated region
    $region34: #{net_forward.1} parent=1 // pred_check
      _
    $region35: #{net_forward.1} parent=1 // pred_check_branch
      %2905 = sbr.rel (0) target = $region37
    $region36: #{net_forward.1} parent=1 // pred_region
      _
    $region37: #{net_forward.1} parent=1 // pred_fallthru
      _
    // Predicated region
    $region38: #{net_forward.1} parent=1 // pred_check
      _
    $region39: #{net_forward.1} parent=1 // pred_check_branch
      %2907 = sbr.rel (0) target = $region41
    $region40: #{net_forward.1} parent=1 // pred_region
      _
    $region41: #{net_forward.1} parent=1 // pred_fallthru
      _
    %2908 = vsyncpa [#allocation3], 1
    %2909 = vsyncpa [#allocation5], 1

</llo_original>
